<compile_context>
chip_gen: v7x
topology: tpu7x:2x2x1
jax: 0.10.0
libtpu: 0.0.40
codegen_flags: <defaults>
</compile_context>

<pallas_src>
import numpy as np
import jax
import jax.numpy as jnp
from jax import lax
from jax.experimental import pallas as pl
from jax.experimental.pallas import tpu as pltpu  # noqa: F401  (TPU backend)

NEG_SLOPE = 0.2  # GATConv default LeakyReLU negative slope


def fused_gnn_kernel(x_ref, adjb_ref, w1_ref, a1d_ref, a1s_ref, b1_ref,
                     w2_ref, a2d_ref, a2s_ref, b2_ref, out_ref):
    """Whole SimpleGNN forward, everything resident in VMEM.

    x_ref   : [N, F]       node features
    adjb_ref: [N, N]       additive mask: 0 on edge j->i (incl. self loop), -1e30 otherwise
    w1_ref  : [F, H*C1]    conv1 projection, all heads fused (lane-dense)
    a1d_ref : [H*C1, H]    block-diagonal dst attention vectors (all heads)
    a1s_ref : [H*C1, H]    block-diagonal src attention vectors (all heads)
    b1_ref  : [1, H*C1]    conv1 bias
    w2_ref  : [H*C1, C2]   conv2 projection (single head)
    a2d_ref : [C2, 1]      conv2 dst attention vector
    a2s_ref : [1, C2]      conv2 src attention vector
    b2_ref  : [1, C2]      conv2 bias
    out_ref : [N, C2]      log-softmax output
    """
    x = x_ref[...]
    adj_bias = adjb_ref[...]
    w2 = w2_ref[...]
    b1 = b1_ref[...]

    N = x.shape[0]
    H = a1d_ref.shape[1]
    C1 = w1_ref.shape[1] // H
    C2 = w2.shape[1]

    # ---------------- conv1: all heads in fused matmuls ----------------
    xh = jnp.dot(x, w1_ref[...], preferred_element_type=jnp.float32)           # [N, H*C1]
    alpha_dst = jnp.dot(xh, a1d_ref[...], preferred_element_type=jnp.float32)  # [N, H]
    # [H, N] directly from the MXU (avoids per-head column->row transposes)
    alpha_src = lax.dot_general(a1s_ref[...], xh, (((0,), (1,)), ((), ())),
                                preferred_element_type=jnp.float32)            # [H, N]

    # z = elu(concat_h(att_h @ xh_h) + b1) ; xh2 = z @ W2.
    # Since z @ W2 == sum_h z_h @ W2[h*C1:(h+1)*C1], accumulate per head and
    # never materialize the [N, H*C1] post-attention concat.
    xh2 = jnp.zeros((N, C2), jnp.float32)
    for h in range(H):  # static trace-time unroll (H = 8)
        s = alpha_dst[:, h:h + 1] + alpha_src[h:h + 1, :]                      # [N, N]
        s = jnp.where(s > 0, s, NEG_SLOPE * s)                                 # LeakyReLU
        s = s + adj_bias                                                       # mask non-edges
        m = jnp.max(s, axis=-1, keepdims=True)
        p = jnp.exp(s - m)
        l = jnp.sum(p, axis=-1, keepdims=True)
        agg = jnp.dot(p, xh[:, h * C1:(h + 1) * C1],
                      preferred_element_type=jnp.float32)                      # [N, C1]
        zh = agg * pl.reciprocal(l, approx=True) + b1[:, h * C1:(h + 1) * C1]
        zh = jnp.where(zh > 0, zh, jnp.exp(jnp.minimum(zh, 0.0)) - 1.0)        # ELU
        xh2 = xh2 + jnp.dot(zh, w2[h * C1:(h + 1) * C1, :],
                            preferred_element_type=jnp.float32)                # [N, C2]

    # ---------------- conv2: single head, concat=False -----------------
    d2 = jnp.dot(xh2, a2d_ref[...], preferred_element_type=jnp.float32)        # [N, 1]
    s2 = lax.dot_general(a2s_ref[...], xh2, (((1,), (1,)), ((), ())),
                         preferred_element_type=jnp.float32)                   # [1, N]
    sc = d2 + s2
    sc = jnp.where(sc > 0, sc, NEG_SLOPE * sc)
    sc = sc + adj_bias
    m2 = jnp.max(sc, axis=-1, keepdims=True)
    p2 = jnp.exp(sc - m2)
    l2 = jnp.sum(p2, axis=-1, keepdims=True)
    agg2 = jnp.dot(p2, xh2, preferred_element_type=jnp.float32)                # [N, C2]
    y = agg2 * pl.reciprocal(l2, approx=True) + b2_ref[...]

    # log_softmax over classes; single narrow (lane-width C2) store to HBM.
    my = jnp.max(y, axis=-1, keepdims=True)
    zy = y - my
    out_ref[...] = zy - jnp.log(jnp.sum(jnp.exp(zy), axis=-1, keepdims=True))


def simple_gnn_forward(x, adj_bias, params):
    # TODO(synk): training-mode dropout (p=0.6) on inputs and attention coeffs
    # is a no-op in eval mode and is not implemented here.
    H, F_, C1 = params["w1"].shape
    C2 = params["w2"].shape[-1]
    N = x.shape[0]

    # conv1 projection fused across heads -> [F, H*C1]
    w1_all = jnp.transpose(params["w1"], (1, 0, 2)).reshape(F_, H * C1)
    # block-diagonal attention-vector matrices: one matmul yields all heads
    eye = jnp.eye(H, dtype=jnp.float32)
    a1_dst_blk = (params["a1_dst"][:, :, None] * eye[:, None, :]).reshape(H * C1, H)
    a1_src_blk = (params["a1_src"][:, :, None] * eye[:, None, :]).reshape(H * C1, H)

    w2 = params["w2"][0]                          # [H*C1, C2]
    a2_dst = params["a2_dst"].reshape(C2, 1)
    a2_src = params["a2_src"].reshape(1, C2)
    b1 = params["b1"].reshape(1, H * C1)
    b2 = params["b2"].reshape(1, C2)

    # Whole graph fits comfortably in VMEM at these sizes; one fused call
    # removes extra HBM round trips and all JAX-level transposes/reshapes.
    # TODO(synk): for large N, tile the target-node axis (grid over row blocks
    # of adj_bias, flash-style online softmax) and split into two pallas_calls.
    return pl.pallas_call(
        fused_gnn_kernel,
        out_shape=jax.ShapeDtypeStruct((N, C2), jnp.float32),
    )(x, adj_bias, w1_all, a1_dst_blk, a1_src_blk, b1, w2, a2_dst, a2_src, b2)


def build_adjacency_bias(edge_index, num_nodes):
    adj = np.zeros((num_nodes, num_nodes), dtype=np.float32)
    src, dst = edge_index
    adj[dst, src] = 1.0
    adj[np.arange(num_nodes), np.arange(num_nodes)] = 1.0  # add_self_loops=True
    # additive bias: 0 on edges, -1e30 elsewhere (no in-kernel N^2 select)
    return jnp.asarray(np.where(adj > 0, 0.0, -1e30).astype(np.float32))


if __name__ == "__main__":
    NUM_NODES = 16
    NUM_FEATURES = 16
    NUM_CLASSES = 4
    HIDDEN = 8
    HEADS = 8

    key = jax.random.PRNGKey(0)
    ks = jax.random.split(key, 8)

    params = {
        # conv1: GATConv(num_features, 8, heads=8)
        "w1": 0.1 * jax.random.normal(ks[0], (HEADS, NUM_FEATURES, HIDDEN), jnp.float32),
        "a1_src": 0.1 * jax.random.normal(ks[1], (HEADS, HIDDEN), jnp.float32),
        "a1_dst": 0.1 * jax.random.normal(ks[2], (HEADS, HIDDEN), jnp.float32),
        "b1": jnp.zeros((HEADS * HIDDEN,), jnp.float32),
        # conv2: GATConv(64, num_classes, heads=1, concat=False)
        "w2": 0.1 * jax.random.normal(ks[3], (1, HEADS * HIDDEN, NUM_CLASSES), jnp.float32),
        "a2_src": 0.1 * jax.random.normal(ks[4], (1, NUM_CLASSES), jnp.float32),
        "a2_dst": 0.1 * jax.random.normal(ks[5], (1, NUM_CLASSES), jnp.float32),
        "b2": jnp.zeros((NUM_CLASSES,), jnp.float32),
    }

    x = jax.random.normal(ks[6], (NUM_NODES, NUM_FEATURES), jnp.float32)

    # Deterministic edge_index [2, E]: bidirectional ring + skip-3 edges.
    src, dst = [], []
    for i in range(NUM_NODES):
        src += [i, (i + 1) % NUM_NODES, i]
        dst += [(i + 1) % NUM_NODES, i, (i + 3) % NUM_NODES]
    edge_index = np.stack([np.array(src), np.array(dst)])  # [2, 48]
    adj_bias = build_adjacency_bias(edge_index, NUM_NODES)

    out = simple_gnn_forward(x, adj_bias, params)
    out = jax.block_until_ready(out)
    assert out.shape == (NUM_NODES, NUM_CLASSES)
    assert bool(jnp.all(jnp.isfinite(out)))
    print("KERNEL_OK")
</pallas_src>

<mosaic_0001>
module attributes {stable_mosaic.version = 11 : i64} {
  func.func @fused_gnn_kernel(%arg0: memref<16x16xf32, #tpu.memory_space<vmem>>, %arg1: memref<16x16xf32, #tpu.memory_space<vmem>>, %arg2: memref<16x64xf32, #tpu.memory_space<vmem>>, %arg3: memref<64x8xf32, #tpu.memory_space<vmem>>, %arg4: memref<64x8xf32, #tpu.memory_space<vmem>>, %arg5: memref<1x64xf32, #tpu.memory_space<vmem>>, %arg6: memref<64x4xf32, #tpu.memory_space<vmem>>, %arg7: memref<4x1xf32, #tpu.memory_space<vmem>>, %arg8: memref<1x4xf32, #tpu.memory_space<vmem>>, %arg9: memref<1x4xf32, #tpu.memory_space<vmem>>, %arg10: memref<16x4xf32, #tpu.memory_space<vmem>>) attributes {dimension_semantics = [], scalar_prefetch = 0 : i64, scratch_operands = 0 : i64, tpu.core_type = #tpu.core_type<tc>} {
    %c0 = arith.constant 0 : index
    %c0_0 = arith.constant 0 : index
    %0 = vector.load %arg0[%c0, %c0_0] : memref<16x16xf32, #tpu.memory_space<vmem>>, vector<16x16xf32>
    %c0_1 = arith.constant 0 : index
    %c0_2 = arith.constant 0 : index
    %1 = vector.load %arg1[%c0_1, %c0_2] : memref<16x16xf32, #tpu.memory_space<vmem>>, vector<16x16xf32>
    %c0_3 = arith.constant 0 : index
    %c0_4 = arith.constant 0 : index
    %2 = vector.load %arg6[%c0_3, %c0_4] : memref<64x4xf32, #tpu.memory_space<vmem>>, vector<64x4xf32>
    %c0_5 = arith.constant 0 : index
    %c0_6 = arith.constant 0 : index
    %3 = vector.load %arg5[%c0_5, %c0_6] : memref<1x64xf32, #tpu.memory_space<vmem>>, vector<1x64xf32>
    %c0_7 = arith.constant 0 : index
    %c0_8 = arith.constant 0 : index
    %4 = vector.load %arg2[%c0_7, %c0_8] : memref<16x64xf32, #tpu.memory_space<vmem>>, vector<16x64xf32>
    %cst = arith.constant dense<0.000000e+00> : vector<16x64xf32>
    %5 = tpu.matmul %0, %4, %cst {dimension_numbers = #tpu.dot_dimension_numbers<[1], [0], [0], [1], [0, 0, 1, 1], [], []>} : vector<16x16xf32>, vector<16x64xf32>, vector<16x64xf32> -> vector<16x64xf32>
    %c0_9 = arith.constant 0 : index
    %c0_10 = arith.constant 0 : index
    %6 = vector.load %arg3[%c0_9, %c0_10] : memref<64x8xf32, #tpu.memory_space<vmem>>, vector<64x8xf32>
    %cst_11 = arith.constant dense<0.000000e+00> : vector<16x8xf32>
    %7 = tpu.matmul %5, %6, %cst_11 {dimension_numbers = #tpu.dot_dimension_numbers<[1], [0], [0], [1], [0, 0, 1, 1], [], []>} : vector<16x64xf32>, vector<64x8xf32>, vector<16x8xf32> -> vector<16x8xf32>
    %c0_12 = arith.constant 0 : index
    %c0_13 = arith.constant 0 : index
    %8 = vector.load %arg4[%c0_12, %c0_13] : memref<64x8xf32, #tpu.memory_space<vmem>>, vector<64x8xf32>
    %cst_14 = arith.constant dense<0.000000e+00> : vector<8x16xf32>
    %9 = tpu.matmul %8, %5, %cst_14 {dimension_numbers = #tpu.dot_dimension_numbers<[0], [1], [1], [0], [0, 1, 1, 0], [], []>} : vector<64x8xf32>, vector<16x64xf32>, vector<8x16xf32> -> vector<8x16xf32>
    %cst_15 = arith.constant 0.000000e+00 : f32
    %10 = vector.broadcast %cst_15 : f32 to vector<16x4xf32>
    %11 = vector.extract_strided_slice %7 {offsets = [0, 0], sizes = [16, 1], strides = [1, 1]} : vector<16x8xf32> to vector<16x1xf32>
    %12 = vector.extract_strided_slice %9 {offsets = [0, 0], sizes = [1, 16], strides = [1, 1]} : vector<8x16xf32> to vector<1x16xf32>
    %13 = vector.broadcast %11 : vector<16x1xf32> to vector<16x16xf32>
    %14 = vector.broadcast %12 : vector<1x16xf32> to vector<16x16xf32>
    %15 = arith.addf %13, %14 : vector<16x16xf32>
    %cst_16 = arith.constant 0.000000e+00 : f32
    %16 = vector.broadcast %cst_16 : f32 to vector<16x16xf32>
    %17 = arith.cmpf ogt, %15, %16 : vector<16x16xf32>
    %cst_17 = arith.constant 2.000000e-01 : f32
    %18 = vector.broadcast %cst_17 : f32 to vector<16x16xf32>
    %19 = arith.mulf %18, %15 : vector<16x16xf32>
    %20 = arith.select %17, %15, %19 : vector<16x16xi1>, vector<16x16xf32>
    %21 = arith.addf %20, %1 : vector<16x16xf32>
    %cst_18 = arith.constant dense<0xFF800000> : vector<16xf32>
    %22 = vector.multi_reduction <maximumf>, %21, %cst_18 [1] : vector<16x16xf32> to vector<16xf32>
    %23 = vector.shape_cast %22 : vector<16xf32> to vector<16x1xf32>
    %24 = vector.broadcast %23 : vector<16x1xf32> to vector<16x16xf32>
    %25 = arith.subf %21, %24 : vector<16x16xf32>
    %26 = math.exp %25 : vector<16x16xf32>
    %cst_19 = arith.constant dense<0.000000e+00> : vector<16xf32>
    %27 = vector.multi_reduction <add>, %26, %cst_19 [1] : vector<16x16xf32> to vector<16xf32>
    %28 = vector.shape_cast %27 : vector<16xf32> to vector<16x1xf32>
    %29 = vector.extract_strided_slice %5 {offsets = [0, 0], sizes = [16, 8], strides = [1, 1]} : vector<16x64xf32> to vector<16x8xf32>
    %cst_20 = arith.constant dense<0.000000e+00> : vector<16x8xf32>
    %30 = tpu.matmul %26, %29, %cst_20 {dimension_numbers = #tpu.dot_dimension_numbers<[1], [0], [0], [1], [0, 0, 1, 1], [], []>} : vector<16x16xf32>, vector<16x8xf32>, vector<16x8xf32> -> vector<16x8xf32>
    %31 = tpu.reciprocal %28 {approx = true} : vector<16x1xf32> -> vector<16x1xf32>
    %32 = vector.broadcast %31 : vector<16x1xf32> to vector<16x8xf32>
    %33 = arith.mulf %30, %32 : vector<16x8xf32>
    %34 = vector.extract_strided_slice %3 {offsets = [0, 0], sizes = [1, 8], strides = [1, 1]} : vector<1x64xf32> to vector<1x8xf32>
    %35 = vector.broadcast %34 : vector<1x8xf32> to vector<16x8xf32>
    %36 = arith.addf %33, %35 : vector<16x8xf32>
    %cst_21 = arith.constant 0.000000e+00 : f32
    %37 = vector.broadcast %cst_21 : f32 to vector<16x8xf32>
    %38 = arith.cmpf ogt, %36, %37 : vector<16x8xf32>
    %cst_22 = arith.constant 0.000000e+00 : f32
    %39 = vector.broadcast %cst_22 : f32 to vector<16x8xf32>
    %40 = arith.minimumf %36, %39 : vector<16x8xf32>
    %41 = math.exp %40 : vector<16x8xf32>
    %cst_23 = arith.constant 1.000000e+00 : f32
    %42 = vector.broadcast %cst_23 : f32 to vector<16x8xf32>
    %43 = arith.subf %41, %42 : vector<16x8xf32>
    %44 = arith.select %38, %36, %43 : vector<16x8xi1>, vector<16x8xf32>
    %45 = vector.extract_strided_slice %2 {offsets = [0, 0], sizes = [8, 4], strides = [1, 1]} : vector<64x4xf32> to vector<8x4xf32>
    %cst_24 = arith.constant dense<0.000000e+00> : vector<16x4xf32>
    %46 = tpu.matmul %44, %45, %cst_24 {dimension_numbers = #tpu.dot_dimension_numbers<[1], [0], [0], [1], [0, 0, 1, 1], [], []>} : vector<16x8xf32>, vector<8x4xf32>, vector<16x4xf32> -> vector<16x4xf32>
    %47 = arith.addf %10, %46 : vector<16x4xf32>
    %48 = vector.extract_strided_slice %7 {offsets = [0, 1], sizes = [16, 1], strides = [1, 1]} : vector<16x8xf32> to vector<16x1xf32>
    %49 = vector.extract_strided_slice %9 {offsets = [1, 0], sizes = [1, 16], strides = [1, 1]} : vector<8x16xf32> to vector<1x16xf32>
    %50 = vector.broadcast %48 : vector<16x1xf32> to vector<16x16xf32>
    %51 = vector.broadcast %49 : vector<1x16xf32> to vector<16x16xf32>
    %52 = arith.addf %50, %51 : vector<16x16xf32>
    %cst_25 = arith.constant 0.000000e+00 : f32
    %53 = vector.broadcast %cst_25 : f32 to vector<16x16xf32>
    %54 = arith.cmpf ogt, %52, %53 : vector<16x16xf32>
    %cst_26 = arith.constant 2.000000e-01 : f32
    %55 = vector.broadcast %cst_26 : f32 to vector<16x16xf32>
    %56 = arith.mulf %55, %52 : vector<16x16xf32>
    %57 = arith.select %54, %52, %56 : vector<16x16xi1>, vector<16x16xf32>
    %58 = arith.addf %57, %1 : vector<16x16xf32>
    %cst_27 = arith.constant dense<0xFF800000> : vector<16xf32>
    %59 = vector.multi_reduction <maximumf>, %58, %cst_27 [1] : vector<16x16xf32> to vector<16xf32>
    %60 = vector.shape_cast %59 : vector<16xf32> to vector<16x1xf32>
    %61 = vector.broadcast %60 : vector<16x1xf32> to vector<16x16xf32>
    %62 = arith.subf %58, %61 : vector<16x16xf32>
    %63 = math.exp %62 : vector<16x16xf32>
    %cst_28 = arith.constant dense<0.000000e+00> : vector<16xf32>
    %64 = vector.multi_reduction <add>, %63, %cst_28 [1] : vector<16x16xf32> to vector<16xf32>
    %65 = vector.shape_cast %64 : vector<16xf32> to vector<16x1xf32>
    %66 = vector.extract_strided_slice %5 {offsets = [0, 8], sizes = [16, 8], strides = [1, 1]} : vector<16x64xf32> to vector<16x8xf32>
    %cst_29 = arith.constant dense<0.000000e+00> : vector<16x8xf32>
    %67 = tpu.matmul %63, %66, %cst_29 {dimension_numbers = #tpu.dot_dimension_numbers<[1], [0], [0], [1], [0, 0, 1, 1], [], []>} : vector<16x16xf32>, vector<16x8xf32>, vector<16x8xf32> -> vector<16x8xf32>
    %68 = tpu.reciprocal %65 {approx = true} : vector<16x1xf32> -> vector<16x1xf32>
    %69 = vector.broadcast %68 : vector<16x1xf32> to vector<16x8xf32>
    %70 = arith.mulf %67, %69 : vector<16x8xf32>
    %71 = vector.extract_strided_slice %3 {offsets = [0, 8], sizes = [1, 8], strides = [1, 1]} : vector<1x64xf32> to vector<1x8xf32>
    %72 = vector.broadcast %71 : vector<1x8xf32> to vector<16x8xf32>
    %73 = arith.addf %70, %72 : vector<16x8xf32>
    %cst_30 = arith.constant 0.000000e+00 : f32
    %74 = vector.broadcast %cst_30 : f32 to vector<16x8xf32>
    %75 = arith.cmpf ogt, %73, %74 : vector<16x8xf32>
    %cst_31 = arith.constant 0.000000e+00 : f32
    %76 = vector.broadcast %cst_31 : f32 to vector<16x8xf32>
    %77 = arith.minimumf %73, %76 : vector<16x8xf32>
    %78 = math.exp %77 : vector<16x8xf32>
    %cst_32 = arith.constant 1.000000e+00 : f32
    %79 = vector.broadcast %cst_32 : f32 to vector<16x8xf32>
    %80 = arith.subf %78, %79 : vector<16x8xf32>
    %81 = arith.select %75, %73, %80 : vector<16x8xi1>, vector<16x8xf32>
    %82 = vector.extract_strided_slice %2 {offsets = [8, 0], sizes = [8, 4], strides = [1, 1]} : vector<64x4xf32> to vector<8x4xf32>
    %cst_33 = arith.constant dense<0.000000e+00> : vector<16x4xf32>
    %83 = tpu.matmul %81, %82, %cst_33 {dimension_numbers = #tpu.dot_dimension_numbers<[1], [0], [0], [1], [0, 0, 1, 1], [], []>} : vector<16x8xf32>, vector<8x4xf32>, vector<16x4xf32> -> vector<16x4xf32>
    %84 = arith.addf %47, %83 : vector<16x4xf32>
    %85 = vector.extract_strided_slice %7 {offsets = [0, 2], sizes = [16, 1], strides = [1, 1]} : vector<16x8xf32> to vector<16x1xf32>
    %86 = vector.extract_strided_slice %9 {offsets = [2, 0], sizes = [1, 16], strides = [1, 1]} : vector<8x16xf32> to vector<1x16xf32>
    %87 = vector.broadcast %85 : vector<16x1xf32> to vector<16x16xf32>
    %88 = vector.broadcast %86 : vector<1x16xf32> to vector<16x16xf32>
    %89 = arith.addf %87, %88 : vector<16x16xf32>
    %cst_34 = arith.constant 0.000000e+00 : f32
    %90 = vector.broadcast %cst_34 : f32 to vector<16x16xf32>
    %91 = arith.cmpf ogt, %89, %90 : vector<16x16xf32>
    %cst_35 = arith.constant 2.000000e-01 : f32
    %92 = vector.broadcast %cst_35 : f32 to vector<16x16xf32>
    %93 = arith.mulf %92, %89 : vector<16x16xf32>
    %94 = arith.select %91, %89, %93 : vector<16x16xi1>, vector<16x16xf32>
    %95 = arith.addf %94, %1 : vector<16x16xf32>
    %cst_36 = arith.constant dense<0xFF800000> : vector<16xf32>
    %96 = vector.multi_reduction <maximumf>, %95, %cst_36 [1] : vector<16x16xf32> to vector<16xf32>
    %97 = vector.shape_cast %96 : vector<16xf32> to vector<16x1xf32>
    %98 = vector.broadcast %97 : vector<16x1xf32> to vector<16x16xf32>
    %99 = arith.subf %95, %98 : vector<16x16xf32>
    %100 = math.exp %99 : vector<16x16xf32>
    %cst_37 = arith.constant dense<0.000000e+00> : vector<16xf32>
    %101 = vector.multi_reduction <add>, %100, %cst_37 [1] : vector<16x16xf32> to vector<16xf32>
    %102 = vector.shape_cast %101 : vector<16xf32> to vector<16x1xf32>
    %103 = vector.extract_strided_slice %5 {offsets = [0, 16], sizes = [16, 8], strides = [1, 1]} : vector<16x64xf32> to vector<16x8xf32>
    %cst_38 = arith.constant dense<0.000000e+00> : vector<16x8xf32>
    %104 = tpu.matmul %100, %103, %cst_38 {dimension_numbers = #tpu.dot_dimension_numbers<[1], [0], [0], [1], [0, 0, 1, 1], [], []>} : vector<16x16xf32>, vector<16x8xf32>, vector<16x8xf32> -> vector<16x8xf32>
    %105 = tpu.reciprocal %102 {approx = true} : vector<16x1xf32> -> vector<16x1xf32>
    %106 = vector.broadcast %105 : vector<16x1xf32> to vector<16x8xf32>
    %107 = arith.mulf %104, %106 : vector<16x8xf32>
    %108 = vector.extract_strided_slice %3 {offsets = [0, 16], sizes = [1, 8], strides = [1, 1]} : vector<1x64xf32> to vector<1x8xf32>
    %109 = vector.broadcast %108 : vector<1x8xf32> to vector<16x8xf32>
    %110 = arith.addf %107, %109 : vector<16x8xf32>
    %cst_39 = arith.constant 0.000000e+00 : f32
    %111 = vector.broadcast %cst_39 : f32 to vector<16x8xf32>
    %112 = arith.cmpf ogt, %110, %111 : vector<16x8xf32>
    %cst_40 = arith.constant 0.000000e+00 : f32
    %113 = vector.broadcast %cst_40 : f32 to vector<16x8xf32>
    %114 = arith.minimumf %110, %113 : vector<16x8xf32>
    %115 = math.exp %114 : vector<16x8xf32>
    %cst_41 = arith.constant 1.000000e+00 : f32
    %116 = vector.broadcast %cst_41 : f32 to vector<16x8xf32>
    %117 = arith.subf %115, %116 : vector<16x8xf32>
    %118 = arith.select %112, %110, %117 : vector<16x8xi1>, vector<16x8xf32>
    %119 = vector.extract_strided_slice %2 {offsets = [16, 0], sizes = [8, 4], strides = [1, 1]} : vector<64x4xf32> to vector<8x4xf32>
    %cst_42 = arith.constant dense<0.000000e+00> : vector<16x4xf32>
    %120 = tpu.matmul %118, %119, %cst_42 {dimension_numbers = #tpu.dot_dimension_numbers<[1], [0], [0], [1], [0, 0, 1, 1], [], []>} : vector<16x8xf32>, vector<8x4xf32>, vector<16x4xf32> -> vector<16x4xf32>
    %121 = arith.addf %84, %120 : vector<16x4xf32>
    %122 = vector.extract_strided_slice %7 {offsets = [0, 3], sizes = [16, 1], strides = [1, 1]} : vector<16x8xf32> to vector<16x1xf32>
    %123 = vector.extract_strided_slice %9 {offsets = [3, 0], sizes = [1, 16], strides = [1, 1]} : vector<8x16xf32> to vector<1x16xf32>
    %124 = vector.broadcast %122 : vector<16x1xf32> to vector<16x16xf32>
    %125 = vector.broadcast %123 : vector<1x16xf32> to vector<16x16xf32>
    %126 = arith.addf %124, %125 : vector<16x16xf32>
    %cst_43 = arith.constant 0.000000e+00 : f32
    %127 = vector.broadcast %cst_43 : f32 to vector<16x16xf32>
    %128 = arith.cmpf ogt, %126, %127 : vector<16x16xf32>
    %cst_44 = arith.constant 2.000000e-01 : f32
    %129 = vector.broadcast %cst_44 : f32 to vector<16x16xf32>
    %130 = arith.mulf %129, %126 : vector<16x16xf32>
    %131 = arith.select %128, %126, %130 : vector<16x16xi1>, vector<16x16xf32>
    %132 = arith.addf %131, %1 : vector<16x16xf32>
    %cst_45 = arith.constant dense<0xFF800000> : vector<16xf32>
    %133 = vector.multi_reduction <maximumf>, %132, %cst_45 [1] : vector<16x16xf32> to vector<16xf32>
    %134 = vector.shape_cast %133 : vector<16xf32> to vector<16x1xf32>
    %135 = vector.broadcast %134 : vector<16x1xf32> to vector<16x16xf32>
    %136 = arith.subf %132, %135 : vector<16x16xf32>
    %137 = math.exp %136 : vector<16x16xf32>
    %cst_46 = arith.constant dense<0.000000e+00> : vector<16xf32>
    %138 = vector.multi_reduction <add>, %137, %cst_46 [1] : vector<16x16xf32> to vector<16xf32>
    %139 = vector.shape_cast %138 : vector<16xf32> to vector<16x1xf32>
    %140 = vector.extract_strided_slice %5 {offsets = [0, 24], sizes = [16, 8], strides = [1, 1]} : vector<16x64xf32> to vector<16x8xf32>
    %cst_47 = arith.constant dense<0.000000e+00> : vector<16x8xf32>
    %141 = tpu.matmul %137, %140, %cst_47 {dimension_numbers = #tpu.dot_dimension_numbers<[1], [0], [0], [1], [0, 0, 1, 1], [], []>} : vector<16x16xf32>, vector<16x8xf32>, vector<16x8xf32> -> vector<16x8xf32>
    %142 = tpu.reciprocal %139 {approx = true} : vector<16x1xf32> -> vector<16x1xf32>
    %143 = vector.broadcast %142 : vector<16x1xf32> to vector<16x8xf32>
    %144 = arith.mulf %141, %143 : vector<16x8xf32>
    %145 = vector.extract_strided_slice %3 {offsets = [0, 24], sizes = [1, 8], strides = [1, 1]} : vector<1x64xf32> to vector<1x8xf32>
    %146 = vector.broadcast %145 : vector<1x8xf32> to vector<16x8xf32>
    %147 = arith.addf %144, %146 : vector<16x8xf32>
    %cst_48 = arith.constant 0.000000e+00 : f32
    %148 = vector.broadcast %cst_48 : f32 to vector<16x8xf32>
    %149 = arith.cmpf ogt, %147, %148 : vector<16x8xf32>
    %cst_49 = arith.constant 0.000000e+00 : f32
    %150 = vector.broadcast %cst_49 : f32 to vector<16x8xf32>
    %151 = arith.minimumf %147, %150 : vector<16x8xf32>
    %152 = math.exp %151 : vector<16x8xf32>
    %cst_50 = arith.constant 1.000000e+00 : f32
    %153 = vector.broadcast %cst_50 : f32 to vector<16x8xf32>
    %154 = arith.subf %152, %153 : vector<16x8xf32>
    %155 = arith.select %149, %147, %154 : vector<16x8xi1>, vector<16x8xf32>
    %156 = vector.extract_strided_slice %2 {offsets = [24, 0], sizes = [8, 4], strides = [1, 1]} : vector<64x4xf32> to vector<8x4xf32>
    %cst_51 = arith.constant dense<0.000000e+00> : vector<16x4xf32>
    %157 = tpu.matmul %155, %156, %cst_51 {dimension_numbers = #tpu.dot_dimension_numbers<[1], [0], [0], [1], [0, 0, 1, 1], [], []>} : vector<16x8xf32>, vector<8x4xf32>, vector<16x4xf32> -> vector<16x4xf32>
    %158 = arith.addf %121, %157 : vector<16x4xf32>
    %159 = vector.extract_strided_slice %7 {offsets = [0, 4], sizes = [16, 1], strides = [1, 1]} : vector<16x8xf32> to vector<16x1xf32>
    %160 = vector.extract_strided_slice %9 {offsets = [4, 0], sizes = [1, 16], strides = [1, 1]} : vector<8x16xf32> to vector<1x16xf32>
    %161 = vector.broadcast %159 : vector<16x1xf32> to vector<16x16xf32>
    %162 = vector.broadcast %160 : vector<1x16xf32> to vector<16x16xf32>
    %163 = arith.addf %161, %162 : vector<16x16xf32>
    %cst_52 = arith.constant 0.000000e+00 : f32
    %164 = vector.broadcast %cst_52 : f32 to vector<16x16xf32>
    %165 = arith.cmpf ogt, %163, %164 : vector<16x16xf32>
    %cst_53 = arith.constant 2.000000e-01 : f32
    %166 = vector.broadcast %cst_53 : f32 to vector<16x16xf32>
    %167 = arith.mulf %166, %163 : vector<16x16xf32>
    %168 = arith.select %165, %163, %167 : vector<16x16xi1>, vector<16x16xf32>
    %169 = arith.addf %168, %1 : vector<16x16xf32>
    %cst_54 = arith.constant dense<0xFF800000> : vector<16xf32>
    %170 = vector.multi_reduction <maximumf>, %169, %cst_54 [1] : vector<16x16xf32> to vector<16xf32>
    %171 = vector.shape_cast %170 : vector<16xf32> to vector<16x1xf32>
    %172 = vector.broadcast %171 : vector<16x1xf32> to vector<16x16xf32>
    %173 = arith.subf %169, %172 : vector<16x16xf32>
    %174 = math.exp %173 : vector<16x16xf32>
    %cst_55 = arith.constant dense<0.000000e+00> : vector<16xf32>
    %175 = vector.multi_reduction <add>, %174, %cst_55 [1] : vector<16x16xf32> to vector<16xf32>
    %176 = vector.shape_cast %175 : vector<16xf32> to vector<16x1xf32>
    %177 = vector.extract_strided_slice %5 {offsets = [0, 32], sizes = [16, 8], strides = [1, 1]} : vector<16x64xf32> to vector<16x8xf32>
    %cst_56 = arith.constant dense<0.000000e+00> : vector<16x8xf32>
    %178 = tpu.matmul %174, %177, %cst_56 {dimension_numbers = #tpu.dot_dimension_numbers<[1], [0], [0], [1], [0, 0, 1, 1], [], []>} : vector<16x16xf32>, vector<16x8xf32>, vector<16x8xf32> -> vector<16x8xf32>
    %179 = tpu.reciprocal %176 {approx = true} : vector<16x1xf32> -> vector<16x1xf32>
    %180 = vector.broadcast %179 : vector<16x1xf32> to vector<16x8xf32>
    %181 = arith.mulf %178, %180 : vector<16x8xf32>
    %182 = vector.extract_strided_slice %3 {offsets = [0, 32], sizes = [1, 8], strides = [1, 1]} : vector<1x64xf32> to vector<1x8xf32>
    %183 = vector.broadcast %182 : vector<1x8xf32> to vector<16x8xf32>
    %184 = arith.addf %181, %183 : vector<16x8xf32>
    %cst_57 = arith.constant 0.000000e+00 : f32
    %185 = vector.broadcast %cst_57 : f32 to vector<16x8xf32>
    %186 = arith.cmpf ogt, %184, %185 : vector<16x8xf32>
    %cst_58 = arith.constant 0.000000e+00 : f32
    %187 = vector.broadcast %cst_58 : f32 to vector<16x8xf32>
    %188 = arith.minimumf %184, %187 : vector<16x8xf32>
    %189 = math.exp %188 : vector<16x8xf32>
    %cst_59 = arith.constant 1.000000e+00 : f32
    %190 = vector.broadcast %cst_59 : f32 to vector<16x8xf32>
    %191 = arith.subf %189, %190 : vector<16x8xf32>
    %192 = arith.select %186, %184, %191 : vector<16x8xi1>, vector<16x8xf32>
    %193 = vector.extract_strided_slice %2 {offsets = [32, 0], sizes = [8, 4], strides = [1, 1]} : vector<64x4xf32> to vector<8x4xf32>
    %cst_60 = arith.constant dense<0.000000e+00> : vector<16x4xf32>
    %194 = tpu.matmul %192, %193, %cst_60 {dimension_numbers = #tpu.dot_dimension_numbers<[1], [0], [0], [1], [0, 0, 1, 1], [], []>} : vector<16x8xf32>, vector<8x4xf32>, vector<16x4xf32> -> vector<16x4xf32>
    %195 = arith.addf %158, %194 : vector<16x4xf32>
    %196 = vector.extract_strided_slice %7 {offsets = [0, 5], sizes = [16, 1], strides = [1, 1]} : vector<16x8xf32> to vector<16x1xf32>
    %197 = vector.extract_strided_slice %9 {offsets = [5, 0], sizes = [1, 16], strides = [1, 1]} : vector<8x16xf32> to vector<1x16xf32>
    %198 = vector.broadcast %196 : vector<16x1xf32> to vector<16x16xf32>
    %199 = vector.broadcast %197 : vector<1x16xf32> to vector<16x16xf32>
    %200 = arith.addf %198, %199 : vector<16x16xf32>
    %cst_61 = arith.constant 0.000000e+00 : f32
    %201 = vector.broadcast %cst_61 : f32 to vector<16x16xf32>
    %202 = arith.cmpf ogt, %200, %201 : vector<16x16xf32>
    %cst_62 = arith.constant 2.000000e-01 : f32
    %203 = vector.broadcast %cst_62 : f32 to vector<16x16xf32>
    %204 = arith.mulf %203, %200 : vector<16x16xf32>
    %205 = arith.select %202, %200, %204 : vector<16x16xi1>, vector<16x16xf32>
    %206 = arith.addf %205, %1 : vector<16x16xf32>
    %cst_63 = arith.constant dense<0xFF800000> : vector<16xf32>
    %207 = vector.multi_reduction <maximumf>, %206, %cst_63 [1] : vector<16x16xf32> to vector<16xf32>
    %208 = vector.shape_cast %207 : vector<16xf32> to vector<16x1xf32>
    %209 = vector.broadcast %208 : vector<16x1xf32> to vector<16x16xf32>
    %210 = arith.subf %206, %209 : vector<16x16xf32>
    %211 = math.exp %210 : vector<16x16xf32>
    %cst_64 = arith.constant dense<0.000000e+00> : vector<16xf32>
    %212 = vector.multi_reduction <add>, %211, %cst_64 [1] : vector<16x16xf32> to vector<16xf32>
    %213 = vector.shape_cast %212 : vector<16xf32> to vector<16x1xf32>
    %214 = vector.extract_strided_slice %5 {offsets = [0, 40], sizes = [16, 8], strides = [1, 1]} : vector<16x64xf32> to vector<16x8xf32>
    %cst_65 = arith.constant dense<0.000000e+00> : vector<16x8xf32>
    %215 = tpu.matmul %211, %214, %cst_65 {dimension_numbers = #tpu.dot_dimension_numbers<[1], [0], [0], [1], [0, 0, 1, 1], [], []>} : vector<16x16xf32>, vector<16x8xf32>, vector<16x8xf32> -> vector<16x8xf32>
    %216 = tpu.reciprocal %213 {approx = true} : vector<16x1xf32> -> vector<16x1xf32>
    %217 = vector.broadcast %216 : vector<16x1xf32> to vector<16x8xf32>
    %218 = arith.mulf %215, %217 : vector<16x8xf32>
    %219 = vector.extract_strided_slice %3 {offsets = [0, 40], sizes = [1, 8], strides = [1, 1]} : vector<1x64xf32> to vector<1x8xf32>
    %220 = vector.broadcast %219 : vector<1x8xf32> to vector<16x8xf32>
    %221 = arith.addf %218, %220 : vector<16x8xf32>
    %cst_66 = arith.constant 0.000000e+00 : f32
    %222 = vector.broadcast %cst_66 : f32 to vector<16x8xf32>
    %223 = arith.cmpf ogt, %221, %222 : vector<16x8xf32>
    %cst_67 = arith.constant 0.000000e+00 : f32
    %224 = vector.broadcast %cst_67 : f32 to vector<16x8xf32>
    %225 = arith.minimumf %221, %224 : vector<16x8xf32>
    %226 = math.exp %225 : vector<16x8xf32>
    %cst_68 = arith.constant 1.000000e+00 : f32
    %227 = vector.broadcast %cst_68 : f32 to vector<16x8xf32>
    %228 = arith.subf %226, %227 : vector<16x8xf32>
    %229 = arith.select %223, %221, %228 : vector<16x8xi1>, vector<16x8xf32>
    %230 = vector.extract_strided_slice %2 {offsets = [40, 0], sizes = [8, 4], strides = [1, 1]} : vector<64x4xf32> to vector<8x4xf32>
    %cst_69 = arith.constant dense<0.000000e+00> : vector<16x4xf32>
    %231 = tpu.matmul %229, %230, %cst_69 {dimension_numbers = #tpu.dot_dimension_numbers<[1], [0], [0], [1], [0, 0, 1, 1], [], []>} : vector<16x8xf32>, vector<8x4xf32>, vector<16x4xf32> -> vector<16x4xf32>
    %232 = arith.addf %195, %231 : vector<16x4xf32>
    %233 = vector.extract_strided_slice %7 {offsets = [0, 6], sizes = [16, 1], strides = [1, 1]} : vector<16x8xf32> to vector<16x1xf32>
    %234 = vector.extract_strided_slice %9 {offsets = [6, 0], sizes = [1, 16], strides = [1, 1]} : vector<8x16xf32> to vector<1x16xf32>
    %235 = vector.broadcast %233 : vector<16x1xf32> to vector<16x16xf32>
    %236 = vector.broadcast %234 : vector<1x16xf32> to vector<16x16xf32>
    %237 = arith.addf %235, %236 : vector<16x16xf32>
    %cst_70 = arith.constant 0.000000e+00 : f32
    %238 = vector.broadcast %cst_70 : f32 to vector<16x16xf32>
    %239 = arith.cmpf ogt, %237, %238 : vector<16x16xf32>
    %cst_71 = arith.constant 2.000000e-01 : f32
    %240 = vector.broadcast %cst_71 : f32 to vector<16x16xf32>
    %241 = arith.mulf %240, %237 : vector<16x16xf32>
    %242 = arith.select %239, %237, %241 : vector<16x16xi1>, vector<16x16xf32>
    %243 = arith.addf %242, %1 : vector<16x16xf32>
    %cst_72 = arith.constant dense<0xFF800000> : vector<16xf32>
    %244 = vector.multi_reduction <maximumf>, %243, %cst_72 [1] : vector<16x16xf32> to vector<16xf32>
    %245 = vector.shape_cast %244 : vector<16xf32> to vector<16x1xf32>
    %246 = vector.broadcast %245 : vector<16x1xf32> to vector<16x16xf32>
    %247 = arith.subf %243, %246 : vector<16x16xf32>
    %248 = math.exp %247 : vector<16x16xf32>
    %cst_73 = arith.constant dense<0.000000e+00> : vector<16xf32>
    %249 = vector.multi_reduction <add>, %248, %cst_73 [1] : vector<16x16xf32> to vector<16xf32>
    %250 = vector.shape_cast %249 : vector<16xf32> to vector<16x1xf32>
    %251 = vector.extract_strided_slice %5 {offsets = [0, 48], sizes = [16, 8], strides = [1, 1]} : vector<16x64xf32> to vector<16x8xf32>
    %cst_74 = arith.constant dense<0.000000e+00> : vector<16x8xf32>
    %252 = tpu.matmul %248, %251, %cst_74 {dimension_numbers = #tpu.dot_dimension_numbers<[1], [0], [0], [1], [0, 0, 1, 1], [], []>} : vector<16x16xf32>, vector<16x8xf32>, vector<16x8xf32> -> vector<16x8xf32>
    %253 = tpu.reciprocal %250 {approx = true} : vector<16x1xf32> -> vector<16x1xf32>
    %254 = vector.broadcast %253 : vector<16x1xf32> to vector<16x8xf32>
    %255 = arith.mulf %252, %254 : vector<16x8xf32>
    %256 = vector.extract_strided_slice %3 {offsets = [0, 48], sizes = [1, 8], strides = [1, 1]} : vector<1x64xf32> to vector<1x8xf32>
    %257 = vector.broadcast %256 : vector<1x8xf32> to vector<16x8xf32>
    %258 = arith.addf %255, %257 : vector<16x8xf32>
    %cst_75 = arith.constant 0.000000e+00 : f32
    %259 = vector.broadcast %cst_75 : f32 to vector<16x8xf32>
    %260 = arith.cmpf ogt, %258, %259 : vector<16x8xf32>
    %cst_76 = arith.constant 0.000000e+00 : f32
    %261 = vector.broadcast %cst_76 : f32 to vector<16x8xf32>
    %262 = arith.minimumf %258, %261 : vector<16x8xf32>
    %263 = math.exp %262 : vector<16x8xf32>
    %cst_77 = arith.constant 1.000000e+00 : f32
    %264 = vector.broadcast %cst_77 : f32 to vector<16x8xf32>
    %265 = arith.subf %263, %264 : vector<16x8xf32>
    %266 = arith.select %260, %258, %265 : vector<16x8xi1>, vector<16x8xf32>
    %267 = vector.extract_strided_slice %2 {offsets = [48, 0], sizes = [8, 4], strides = [1, 1]} : vector<64x4xf32> to vector<8x4xf32>
    %cst_78 = arith.constant dense<0.000000e+00> : vector<16x4xf32>
    %268 = tpu.matmul %266, %267, %cst_78 {dimension_numbers = #tpu.dot_dimension_numbers<[1], [0], [0], [1], [0, 0, 1, 1], [], []>} : vector<16x8xf32>, vector<8x4xf32>, vector<16x4xf32> -> vector<16x4xf32>
    %269 = arith.addf %232, %268 : vector<16x4xf32>
    %270 = vector.extract_strided_slice %7 {offsets = [0, 7], sizes = [16, 1], strides = [1, 1]} : vector<16x8xf32> to vector<16x1xf32>
    %271 = vector.extract_strided_slice %9 {offsets = [7, 0], sizes = [1, 16], strides = [1, 1]} : vector<8x16xf32> to vector<1x16xf32>
    %272 = vector.broadcast %270 : vector<16x1xf32> to vector<16x16xf32>
    %273 = vector.broadcast %271 : vector<1x16xf32> to vector<16x16xf32>
    %274 = arith.addf %272, %273 : vector<16x16xf32>
    %cst_79 = arith.constant 0.000000e+00 : f32
    %275 = vector.broadcast %cst_79 : f32 to vector<16x16xf32>
    %276 = arith.cmpf ogt, %274, %275 : vector<16x16xf32>
    %cst_80 = arith.constant 2.000000e-01 : f32
    %277 = vector.broadcast %cst_80 : f32 to vector<16x16xf32>
    %278 = arith.mulf %277, %274 : vector<16x16xf32>
    %279 = arith.select %276, %274, %278 : vector<16x16xi1>, vector<16x16xf32>
    %280 = arith.addf %279, %1 : vector<16x16xf32>
    %cst_81 = arith.constant dense<0xFF800000> : vector<16xf32>
    %281 = vector.multi_reduction <maximumf>, %280, %cst_81 [1] : vector<16x16xf32> to vector<16xf32>
    %282 = vector.shape_cast %281 : vector<16xf32> to vector<16x1xf32>
    %283 = vector.broadcast %282 : vector<16x1xf32> to vector<16x16xf32>
    %284 = arith.subf %280, %283 : vector<16x16xf32>
    %285 = math.exp %284 : vector<16x16xf32>
    %cst_82 = arith.constant dense<0.000000e+00> : vector<16xf32>
    %286 = vector.multi_reduction <add>, %285, %cst_82 [1] : vector<16x16xf32> to vector<16xf32>
    %287 = vector.shape_cast %286 : vector<16xf32> to vector<16x1xf32>
    %288 = vector.extract_strided_slice %5 {offsets = [0, 56], sizes = [16, 8], strides = [1, 1]} : vector<16x64xf32> to vector<16x8xf32>
    %cst_83 = arith.constant dense<0.000000e+00> : vector<16x8xf32>
    %289 = tpu.matmul %285, %288, %cst_83 {dimension_numbers = #tpu.dot_dimension_numbers<[1], [0], [0], [1], [0, 0, 1, 1], [], []>} : vector<16x16xf32>, vector<16x8xf32>, vector<16x8xf32> -> vector<16x8xf32>
    %290 = tpu.reciprocal %287 {approx = true} : vector<16x1xf32> -> vector<16x1xf32>
    %291 = vector.broadcast %290 : vector<16x1xf32> to vector<16x8xf32>
    %292 = arith.mulf %289, %291 : vector<16x8xf32>
    %293 = vector.extract_strided_slice %3 {offsets = [0, 56], sizes = [1, 8], strides = [1, 1]} : vector<1x64xf32> to vector<1x8xf32>
    %294 = vector.broadcast %293 : vector<1x8xf32> to vector<16x8xf32>
    %295 = arith.addf %292, %294 : vector<16x8xf32>
    %cst_84 = arith.constant 0.000000e+00 : f32
    %296 = vector.broadcast %cst_84 : f32 to vector<16x8xf32>
    %297 = arith.cmpf ogt, %295, %296 : vector<16x8xf32>
    %cst_85 = arith.constant 0.000000e+00 : f32
    %298 = vector.broadcast %cst_85 : f32 to vector<16x8xf32>
    %299 = arith.minimumf %295, %298 : vector<16x8xf32>
    %300 = math.exp %299 : vector<16x8xf32>
    %cst_86 = arith.constant 1.000000e+00 : f32
    %301 = vector.broadcast %cst_86 : f32 to vector<16x8xf32>
    %302 = arith.subf %300, %301 : vector<16x8xf32>
    %303 = arith.select %297, %295, %302 : vector<16x8xi1>, vector<16x8xf32>
    %304 = vector.extract_strided_slice %2 {offsets = [56, 0], sizes = [8, 4], strides = [1, 1]} : vector<64x4xf32> to vector<8x4xf32>
    %cst_87 = arith.constant dense<0.000000e+00> : vector<16x4xf32>
    %305 = tpu.matmul %303, %304, %cst_87 {dimension_numbers = #tpu.dot_dimension_numbers<[1], [0], [0], [1], [0, 0, 1, 1], [], []>} : vector<16x8xf32>, vector<8x4xf32>, vector<16x4xf32> -> vector<16x4xf32>
    %306 = arith.addf %269, %305 : vector<16x4xf32>
    %c0_88 = arith.constant 0 : index
    %c0_89 = arith.constant 0 : index
    %307 = vector.load %arg7[%c0_88, %c0_89] : memref<4x1xf32, #tpu.memory_space<vmem>>, vector<4x1xf32>
    %cst_90 = arith.constant dense<0.000000e+00> : vector<16x1xf32>
    %308 = tpu.matmul %306, %307, %cst_90 {dimension_numbers = #tpu.dot_dimension_numbers<[1], [0], [0], [1], [0, 0, 1, 1], [], []>} : vector<16x4xf32>, vector<4x1xf32>, vector<16x1xf32> -> vector<16x1xf32>
    %c0_91 = arith.constant 0 : index
    %c0_92 = arith.constant 0 : index
    %309 = vector.load %arg8[%c0_91, %c0_92] : memref<1x4xf32, #tpu.memory_space<vmem>>, vector<1x4xf32>
    %cst_93 = arith.constant dense<0.000000e+00> : vector<1x16xf32>
    %310 = tpu.matmul %309, %306, %cst_93 {dimension_numbers = #tpu.dot_dimension_numbers<[1], [1], [0], [0], [0, 0, 1, 0], [], []>} : vector<1x4xf32>, vector<16x4xf32>, vector<1x16xf32> -> vector<1x16xf32>
    %311 = vector.broadcast %308 : vector<16x1xf32> to vector<16x16xf32>
    %312 = vector.broadcast %310 : vector<1x16xf32> to vector<16x16xf32>
    %313 = arith.addf %311, %312 : vector<16x16xf32>
    %cst_94 = arith.constant 0.000000e+00 : f32
    %314 = vector.broadcast %cst_94 : f32 to vector<16x16xf32>
    %315 = arith.cmpf ogt, %313, %314 : vector<16x16xf32>
    %cst_95 = arith.constant 2.000000e-01 : f32
    %316 = vector.broadcast %cst_95 : f32 to vector<16x16xf32>
    %317 = arith.mulf %316, %313 : vector<16x16xf32>
    %318 = arith.select %315, %313, %317 : vector<16x16xi1>, vector<16x16xf32>
    %319 = arith.addf %318, %1 : vector<16x16xf32>
    %cst_96 = arith.constant dense<0xFF800000> : vector<16xf32>
    %320 = vector.multi_reduction <maximumf>, %319, %cst_96 [1] : vector<16x16xf32> to vector<16xf32>
    %321 = vector.shape_cast %320 : vector<16xf32> to vector<16x1xf32>
    %322 = vector.broadcast %321 : vector<16x1xf32> to vector<16x16xf32>
    %323 = arith.subf %319, %322 : vector<16x16xf32>
    %324 = math.exp %323 : vector<16x16xf32>
    %cst_97 = arith.constant dense<0.000000e+00> : vector<16xf32>
    %325 = vector.multi_reduction <add>, %324, %cst_97 [1] : vector<16x16xf32> to vector<16xf32>
    %326 = vector.shape_cast %325 : vector<16xf32> to vector<16x1xf32>
    %cst_98 = arith.constant dense<0.000000e+00> : vector<16x4xf32>
    %327 = tpu.matmul %324, %306, %cst_98 {dimension_numbers = #tpu.dot_dimension_numbers<[1], [0], [0], [1], [0, 0, 1, 1], [], []>} : vector<16x16xf32>, vector<16x4xf32>, vector<16x4xf32> -> vector<16x4xf32>
    %328 = tpu.reciprocal %326 {approx = true} : vector<16x1xf32> -> vector<16x1xf32>
    %329 = vector.broadcast %328 : vector<16x1xf32> to vector<16x4xf32>
    %330 = arith.mulf %327, %329 : vector<16x4xf32>
    %c0_99 = arith.constant 0 : index
    %c0_100 = arith.constant 0 : index
    %331 = vector.load %arg9[%c0_99, %c0_100] : memref<1x4xf32, #tpu.memory_space<vmem>>, vector<1x4xf32>
    %332 = vector.broadcast %331 : vector<1x4xf32> to vector<16x4xf32>
    %333 = arith.addf %330, %332 : vector<16x4xf32>
    %cst_101 = arith.constant dense<0xFF800000> : vector<16xf32>
    %334 = vector.multi_reduction <maximumf>, %333, %cst_101 [1] : vector<16x4xf32> to vector<16xf32>
    %335 = vector.shape_cast %334 : vector<16xf32> to vector<16x1xf32>
    %336 = vector.broadcast %335 : vector<16x1xf32> to vector<16x4xf32>
    %337 = arith.subf %333, %336 : vector<16x4xf32>
    %338 = math.exp %337 : vector<16x4xf32>
    %cst_102 = arith.constant dense<0.000000e+00> : vector<16xf32>
    %339 = vector.multi_reduction <add>, %338, %cst_102 [1] : vector<16x4xf32> to vector<16xf32>
    %340 = vector.shape_cast %339 : vector<16xf32> to vector<16x1xf32>
    %341 = math.log %340 : vector<16x1xf32>
    %342 = vector.broadcast %341 : vector<16x1xf32> to vector<16x4xf32>
    %343 = arith.subf %337, %342 : vector<16x4xf32>
    %c0_103 = arith.constant 0 : index
    %c0_104 = arith.constant 0 : index
    %344 = vector.load %arg10[%c0_103, %c0_104] : memref<16x4xf32, #tpu.memory_space<vmem>>, vector<16x4xf32>
    tpu.vector_store %arg10[%c0_103, %c0_104], %343 {strides = array<i32>} : memref<16x4xf32, #tpu.memory_space<vmem>>, vector<16x4xf32>,
    return
  }
}

</mosaic_0001>

<llo_original>
// kernel: tpu_custom_call.1
$region0: #{tpu_custom_call.1}
  #allocation0 [shape = 'u32[]', space=smem, size = 0x4, offset = 0x4, fixed_abs, tag = 'smem constant byte address 0x4 - core index']
  #allocation1 [shape = 'u32[144,128]{1,0:T(1,128)}', space=vmem, size = 0x12000, scoped, tag = 'internal scratch']
  %s0 = inlined_call_operand.vmem [shape: f32[16,16], index: 0, kind: input, shape index: {}]
  %s1 = inlined_call_operand.vmem [shape: f32[16,16], index: 1, kind: input, shape index: {}]
  %s2 = inlined_call_operand.vmem [shape: f32[16,64], index: 2, kind: input, shape index: {}]
  %s3 = inlined_call_operand.vmem [shape: f32[64,8], index: 3, kind: input, shape index: {}]
  %s4 = inlined_call_operand.vmem [shape: f32[64,8], index: 4, kind: input, shape index: {}]
  %s5 = inlined_call_operand.vmem [shape: f32[1,64], index: 5, kind: input, shape index: {}]
  %s6 = inlined_call_operand.vmem [shape: f32[64,4], index: 6, kind: input, shape index: {}]
  %s7 = inlined_call_operand.vmem [shape: f32[4,1], index: 7, kind: input, shape index: {}]
  %s8 = inlined_call_operand.vmem [shape: f32[1,4], index: 8, kind: input, shape index: {}]
  %s9 = inlined_call_operand.vmem [shape: f32[1,4], index: 9, kind: input, shape index: {}]
  %s10 = inlined_call_operand.vmem [shape: f32[16,4], index: 10, kind: output, shape index: {}]
  %s11 = sld [smem:[#allocation0]]
  $region50: #{tpu_custom_call.1} parent=0
    _
  %s13 = ssub.s32 1, %s11
  %s14 = scalar_select 0, %s13, %s11
  // Predicated region
  $region2: #{tpu_custom_call.1} parent=0 // pred_check
    _
  $region3: #{tpu_custom_call.1} parent=0 // pred_check_branch
    %16 = sbr.rel (0) target = $region5
  $region4: #{tpu_custom_call.1} parent=0 // pred_region
    _
  $region5: #{tpu_custom_call.1} parent=0 // pred_fallthru
    _
  // Predicated region
  $region6: #{tpu_custom_call.1} parent=0 // pred_check
    _
  $region7: #{tpu_custom_call.1} parent=0 // pred_check_branch
    %18 = sbr.rel (0) target = $region9
  $region8: #{tpu_custom_call.1} parent=0 // pred_region
    _
  $region9: #{tpu_custom_call.1} parent=0 // pred_fallthru
    _
  // Predicated region
  $region10: #{tpu_custom_call.1} parent=0 // pred_check
    _
  $region11: #{tpu_custom_call.1} parent=0 // pred_check_branch
    %20 = sbr.rel (0) target = $region13
  $region12: #{tpu_custom_call.1} parent=0 // pred_region
    _
  $region13: #{tpu_custom_call.1} parent=0 // pred_fallthru
    _
  // Predicated region
  $region14: #{tpu_custom_call.1} parent=0 // pred_check
    _
  $region15: #{tpu_custom_call.1} parent=0 // pred_check_branch
    %22 = sbr.rel (0) target = $region17
  $region16: #{tpu_custom_call.1} parent=0 // pred_region
    _
  $region17: #{tpu_custom_call.1} parent=0 // pred_fallthru
    _
  // Predicated region
  $region18: #{tpu_custom_call.1} parent=0 // pred_check
    _
  $region19: #{tpu_custom_call.1} parent=0 // pred_check_branch
    %24 = sbr.rel (0) target = $region21
  $region20: #{tpu_custom_call.1} parent=0 // pred_region
    _
  $region21: #{tpu_custom_call.1} parent=0 // pred_fallthru
    _
  // Predicated region
  $region22: #{tpu_custom_call.1} parent=0 // pred_check
    _
  $region23: #{tpu_custom_call.1} parent=0 // pred_check_branch
    %26 = sbr.rel (0) target = $region25
  $region24: #{tpu_custom_call.1} parent=0 // pred_region
    _
  $region25: #{tpu_custom_call.1} parent=0 // pred_fallthru
    _
  // Predicated region
  $region26: #{tpu_custom_call.1} parent=0 // pred_check
    _
  $region27: #{tpu_custom_call.1} parent=0 // pred_check_branch
    %28 = sbr.rel (0) target = $region29
  $region28: #{tpu_custom_call.1} parent=0 // pred_region
    _
  $region29: #{tpu_custom_call.1} parent=0 // pred_fallthru
    _
  // Predicated region
  $region30: #{tpu_custom_call.1} parent=0 // pred_check
    _
  $region31: #{tpu_custom_call.1} parent=0 // pred_check_branch
    %30 = sbr.rel (0) target = $region33
  $region32: #{tpu_custom_call.1} parent=0 // pred_region
    _
  $region33: #{tpu_custom_call.1} parent=0 // pred_fallthru
    _
  // Predicated region
  $region34: #{tpu_custom_call.1} parent=0 // pred_check
    _
  $region35: #{tpu_custom_call.1} parent=0 // pred_check_branch
    %32 = sbr.rel (0) target = $region37
  $region36: #{tpu_custom_call.1} parent=0 // pred_region
    _
  $region37: #{tpu_custom_call.1} parent=0 // pred_fallthru
    _
  // Predicated region
  $region38: #{tpu_custom_call.1} parent=0 // pred_check
    _
  $region39: #{tpu_custom_call.1} parent=0 // pred_check_branch
    %34 = sbr.rel (0) target = $region41
  $region40: #{tpu_custom_call.1} parent=0 // pred_region
    _
  $region41: #{tpu_custom_call.1} parent=0 // pred_fallthru
    _
  %v35 = vld [vmem:[%s0] sm:$0xff]
  %v36 = vld [vmem:[%s0 + $0x8] sm:$0xff]
  %v37 = vld [vmem:[%s1] sm:$0xff]
  %v38 = vld [vmem:[%s1 + $0x8] sm:$0xff]
  %v39 = vld [vmem:[%s6] sm:$0xff]
  %v40 = vld [vmem:[%s6 + $0x8] sm:$0xff]
  %v41 = vld [vmem:[%s6 + $0x10] sm:$0xff]
  %v42 = vld [vmem:[%s6 + $0x18] sm:$0xff]
  %v43 = vld [vmem:[%s6 + $0x20] sm:$0xff]
  %v44 = vld [vmem:[%s6 + $0x28] sm:$0xff]
  %v45 = vld [vmem:[%s6 + $0x30] sm:$0xff]
  %v46 = vld [vmem:[%s6 + $0x38] sm:$0xff]
  %v47 = vld [vmem:[%s5] sm:$0x1]
  %v48 = vld [vmem:[%s2] sm:$0xff]
  %v49 = vld [vmem:[%s2 + $0x8] sm:$0xff]
  %vm50 = vcmask 130048
  %v52 = vsel %vm50, %v35, 0
  %v55 = vsel %vm50, %v36, 0
  %57 = vmatprep.subr.mxu0 0.0
  %58 = vmatpush1.msra.mxu0 %v48
  %59 = vmatprep.subr.mxu0 0.0
  %60 = vmatpush1.msra.mxu0 %v49
  %61 = vmatprep.subr.mxu0 0.0
  %62 = vmatpush1.msra.mxu0 0.0
  %63 = vmatprep.subr.mxu0 0.0
  %64 = vmatpush1.msra.mxu0 0.0
  %65 = vmatprep.subr.mxu0 0.0
  %66 = vmatpush1.msra.mxu0 0.0
  %67 = vmatprep.subr.mxu0 0.0
  %68 = vmatpush1.msra.mxu0 0.0
  %69 = vmatprep.subr.mxu0 0.0
  %70 = vmatpush1.msra.mxu0 0.0
  %71 = vmatprep.subr.mxu0 0.0
  %72 = vmatpush1.msra.mxu0 0.0
  %73 = vmatprep.subr.mxu0 0.0
  %74 = vmatpush1.msra.mxu0 0.0
  %75 = vmatprep.subr.mxu0 0.0
  %76 = vmatpush1.msra.mxu0 0.0
  %77 = vmatprep.subr.mxu0 0.0
  %78 = vmatpush1.msra.mxu0 0.0
  %79 = vmatprep.subr.mxu0 0.0
  %80 = vmatpush1.msra.mxu0 0.0
  %81 = vmatprep.subr.mxu0 0.0
  %82 = vmatpush1.msra.mxu0 0.0
  %83 = vmatprep.subr.mxu0 0.0
  %84 = vmatpush1.msra.mxu0 0.0
  %85 = vmatprep.subr.mxu0 0.0
  %86 = vmatpush1.msra.mxu0 0.0
  %87 = vmatprep.subr.mxu0 0.0
  %88 = vmatpush1.msra.mxu0 0.0
  %89 = vmatprep.subr.mxu0 0.0
  %90 = vmatpush1.msra.mxu0 0.0
  %91 = vmatprep.subr.mxu0 0.0
  %92 = vmatpush1.msra.mxu0 0.0
  %93 = vmatprep.subr.mxu0 0.0
  %94 = vmatpush1.msra.mxu0 0.0
  %95 = vmatprep.subr.mxu0 0.0
  %96 = vmatpush1.msra.mxu0 0.0
  %97 = vmatprep.subr.mxu0 0.0
  %98 = vmatpush1.msra.mxu0 0.0
  %99 = vmatprep.subr.mxu0 0.0
  %100 = vmatpush1.msra.mxu0 0.0
  %101 = vmatprep.subr.mxu0 0.0
  %102 = vmatpush1.msra.mxu0 0.0
  %103 = vmatprep.subr.mxu0 0.0
  %104 = vmatpush1.msra.mxu0 0.0
  %105 = vmatprep.subr.mxu0 0.0
  %106 = vmatpush1.msra.mxu0 0.0
  %107 = vmatprep.subr.mxu0 0.0
  %108 = vmatpush1.msra.mxu0 0.0
  %109 = vmatprep.subr.mxu0 0.0
  %110 = vmatpush1.msra.mxu0 0.0
  %111 = vmatprep.subr.mxu0 0.0
  %112 = vmatpush1.msra.mxu0 0.0
  %113 = vmatprep.subr.mxu0 0.0
  %114 = vmatpush1.msra.mxu0 0.0
  %115 = vmatprep.subr.mxu0 0.0
  %116 = vmatpush1.msra.mxu0 0.0
  %117 = vmatprep.subr.mxu0 0.0
  %118 = vmatpush1.msra.mxu0 0.0
  %119 = vmatprep.subr.mxu0 0.0
  %120 = vmatpush1.msra.mxu0 0.0
  %121 = vmatprep.mubr.f32.mxu0 0.0
  %122 = vmatmul.mubr.f32.gmra.mrb[0].mxu0 %v52
  %v123 = vpop.f32.mrb[0].mxu0
  %v124 = vadd.f32 0.0, %v123
  %v125 = vpop.f32.mrb[0].mxu0
  %126 = vmatprep.mubr.f32.mxu0 0.0
  %127 = vmatmul.mubr.f32.gmra.mrb[0].mxu0 %v55
  %v128 = vpop.f32.mrb[0].mxu0
  %v129 = vadd.f32 0.0, %v128
  %v130 = vpop.f32.mrb[0].mxu0
  %131 = vdwg.mxu0
  %v132 = vld [vmem:[%s3] sm:$0xff]
  %v133 = vld [vmem:[%s3 + $0x8] sm:$0xff]
  %v134 = vld [vmem:[%s3 + $0x10] sm:$0xff]
  %v135 = vld [vmem:[%s3 + $0x18] sm:$0xff]
  %v136 = vld [vmem:[%s3 + $0x20] sm:$0xff]
  %v137 = vld [vmem:[%s3 + $0x28] sm:$0xff]
  %v138 = vld [vmem:[%s3 + $0x30] sm:$0xff]
  %v139 = vld [vmem:[%s3 + $0x38] sm:$0xff]
  %vm140 = vcmask 523264
  %v142 = vsel %vm140, %v124, 0
  %v145 = vsel %vm140, %v129, 0
  %147 = vmatprep.subr.mxu0 0.0
  %148 = vmatpush1.msra.mxu0 %v132
  %149 = vmatprep.subr.mxu0 0.0
  %150 = vmatpush1.msra.mxu0 %v133
  %151 = vmatprep.subr.mxu0 0.0
  %152 = vmatpush1.msra.mxu0 %v134
  %153 = vmatprep.subr.mxu0 0.0
  %154 = vmatpush1.msra.mxu0 %v135
  %155 = vmatprep.subr.mxu0 0.0
  %156 = vmatpush1.msra.mxu0 %v136
  %157 = vmatprep.subr.mxu0 0.0
  %158 = vmatpush1.msra.mxu0 %v137
  %159 = vmatprep.subr.mxu0 0.0
  %160 = vmatpush1.msra.mxu0 %v138
  %161 = vmatprep.subr.mxu0 0.0
  %162 = vmatpush1.msra.mxu0 %v139
  %163 = vmatprep.subr.mxu0 0.0
  %164 = vmatpush1.msra.mxu0 0.0
  %165 = vmatprep.subr.mxu0 0.0
  %166 = vmatpush1.msra.mxu0 0.0
  %167 = vmatprep.subr.mxu0 0.0
  %168 = vmatpush1.msra.mxu0 0.0
  %169 = vmatprep.subr.mxu0 0.0
  %170 = vmatpush1.msra.mxu0 0.0
  %171 = vmatprep.subr.mxu0 0.0
  %172 = vmatpush1.msra.mxu0 0.0
  %173 = vmatprep.subr.mxu0 0.0
  %174 = vmatpush1.msra.mxu0 0.0
  %175 = vmatprep.subr.mxu0 0.0
  %176 = vmatpush1.msra.mxu0 0.0
  %177 = vmatprep.subr.mxu0 0.0
  %178 = vmatpush1.msra.mxu0 0.0
  %179 = vmatprep.subr.mxu0 0.0
  %180 = vmatpush1.msra.mxu0 0.0
  %181 = vmatprep.subr.mxu0 0.0
  %182 = vmatpush1.msra.mxu0 0.0
  %183 = vmatprep.subr.mxu0 0.0
  %184 = vmatpush1.msra.mxu0 0.0
  %185 = vmatprep.subr.mxu0 0.0
  %186 = vmatpush1.msra.mxu0 0.0
  %187 = vmatprep.subr.mxu0 0.0
  %188 = vmatpush1.msra.mxu0 0.0
  %189 = vmatprep.subr.mxu0 0.0
  %190 = vmatpush1.msra.mxu0 0.0
  %191 = vmatprep.subr.mxu0 0.0
  %192 = vmatpush1.msra.mxu0 0.0
  %193 = vmatprep.subr.mxu0 0.0
  %194 = vmatpush1.msra.mxu0 0.0
  %195 = vmatprep.subr.mxu0 0.0
  %196 = vmatpush1.msra.mxu0 0.0
  %197 = vmatprep.subr.mxu0 0.0
  %198 = vmatpush1.msra.mxu0 0.0
  %199 = vmatprep.subr.mxu0 0.0
  %200 = vmatpush1.msra.mxu0 0.0
  %201 = vmatprep.subr.mxu0 0.0
  %202 = vmatpush1.msra.mxu0 0.0
  %203 = vmatprep.subr.mxu0 0.0
  %204 = vmatpush1.msra.mxu0 0.0
  %205 = vmatprep.subr.mxu0 0.0
  %206 = vmatpush1.msra.mxu0 0.0
  %207 = vmatprep.subr.mxu0 0.0
  %208 = vmatpush1.msra.mxu0 0.0
  %209 = vmatprep.subr.mxu0 0.0
  %210 = vmatpush1.msra.mxu0 0.0
  %211 = vmatprep.mubr.f32.mxu0 0.0
  %212 = vmatmul.mubr.f32.gmra.mrb[0].mxu0 %v142
  %v213 = vpop.f32.mrb[0].mxu0
  %v214 = vadd.f32 0.0, %v213
  %v215 = vpop.f32.mrb[0].mxu0
  %216 = vmatprep.mubr.f32.mxu0 0.0
  %217 = vmatmul.mubr.f32.gmra.mrb[0].mxu0 %v145
  %v218 = vpop.f32.mrb[0].mxu0
  %v219 = vadd.f32 0.0, %v218
  %v220 = vpop.f32.mrb[0].mxu0
  %221 = vdwg.mxu0
  %v222 = vld [vmem:[%s4] sm:$0xff]
  %v223 = vld [vmem:[%s4 + $0x8] sm:$0xff]
  %v224 = vld [vmem:[%s4 + $0x10] sm:$0xff]
  %v225 = vld [vmem:[%s4 + $0x18] sm:$0xff]
  %v226 = vld [vmem:[%s4 + $0x20] sm:$0xff]
  %v227 = vld [vmem:[%s4 + $0x28] sm:$0xff]
  %v228 = vld [vmem:[%s4 + $0x30] sm:$0xff]
  %v229 = vld [vmem:[%s4 + $0x38] sm:$0xff]
  %230 = vxpose.xlu0.b32.start [1/16] %v222, 128
  %231 = vxpose.xlu0.b32.cont [2/16] %v223, 128
  %232 = vxpose.xlu0.b32.cont [3/16] %v224, 128
  %233 = vxpose.xlu0.b32.cont [4/16] %v225, 128
  %234 = vxpose.xlu0.b32.cont [5/16] %v226, 128
  %235 = vxpose.xlu0.b32.cont [6/16] %v227, 128
  %236 = vxpose.xlu0.b32.cont [7/16] %v228, 128
  %237 = vxpose.xlu0.b32.cont [8/16] %v229, 128
  %238 = vxpose.xlu0.b32.cont [9/16] 0.0, 128
  %239 = vxpose.xlu0.b32.cont [10/16] 0.0, 128
  %240 = vxpose.xlu0.b32.cont [11/16] 0.0, 128
  %241 = vxpose.xlu0.b32.cont [12/16] 0.0, 128
  %242 = vxpose.xlu0.b32.cont [13/16] 0.0, 128
  %243 = vxpose.xlu0.b32.cont [14/16] 0.0, 128
  %244 = vxpose.xlu0.b32.cont [15/16] 0.0, 128
  %245 = vxpose.xlu0.b32.end [16/16] 0.0, 128
  %v246 = vpop.trf.xlu0
  %v247 = vpop.trf.xlu0
  %v248 = vpop.trf.xlu0
  %v249 = vpop.trf.xlu0
  %v250 = vpop.trf.xlu0
  %v251 = vpop.trf.xlu0
  %v252 = vpop.trf.xlu0
  %v253 = vpop.trf.xlu0
  %v254 = vpop.trf.xlu0
  %v255 = vpop.trf.xlu0
  %v256 = vpop.trf.xlu0
  %v257 = vpop.trf.xlu0
  %v258 = vpop.trf.xlu0
  %v259 = vpop.trf.xlu0
  %v260 = vpop.trf.xlu0
  %v261 = vpop.trf.xlu0
  %v263 = vsel %vm140, %v246, 0
  %265 = vmatprep.subr.mxu0 0.0
  %266 = vmatpush1.xpose.msra.mxu0 %v142
  %267 = vmatprep.subr.mxu0 0.0
  %268 = vmatpush1.xpose.msra.mxu0 %v145
  %269 = vmatprep.subr.mxu0 0.0
  %270 = vmatpush1.xpose.msra.mxu0 0.0
  %271 = vmatprep.subr.mxu0 0.0
  %272 = vmatpush1.xpose.msra.mxu0 0.0
  %273 = vmatprep.subr.mxu0 0.0
  %274 = vmatpush1.xpose.msra.mxu0 0.0
  %275 = vmatprep.subr.mxu0 0.0
  %276 = vmatpush1.xpose.msra.mxu0 0.0
  %277 = vmatprep.subr.mxu0 0.0
  %278 = vmatpush1.xpose.msra.mxu0 0.0
  %279 = vmatprep.subr.mxu0 0.0
  %280 = vmatpush1.xpose.msra.mxu0 0.0
  %281 = vmatprep.subr.mxu0 0.0
  %282 = vmatpush1.xpose.msra.mxu0 0.0
  %283 = vmatprep.subr.mxu0 0.0
  %284 = vmatpush1.xpose.msra.mxu0 0.0
  %285 = vmatprep.subr.mxu0 0.0
  %286 = vmatpush1.xpose.msra.mxu0 0.0
  %287 = vmatprep.subr.mxu0 0.0
  %288 = vmatpush1.xpose.msra.mxu0 0.0
  %289 = vmatprep.subr.mxu0 0.0
  %290 = vmatpush1.xpose.msra.mxu0 0.0
  %291 = vmatprep.subr.mxu0 0.0
  %292 = vmatpush1.xpose.msra.mxu0 0.0
  %293 = vmatprep.subr.mxu0 0.0
  %294 = vmatpush1.xpose.msra.mxu0 0.0
  %295 = vmatprep.subr.mxu0 0.0
  %296 = vmatpush1.xpose.msra.mxu0 0.0
  %297 = vmatprep.subr.mxu0 0.0
  %298 = vmatpush1.xpose.msra.mxu0 0.0
  %299 = vmatprep.subr.mxu0 0.0
  %300 = vmatpush1.xpose.msra.mxu0 0.0
  %301 = vmatprep.subr.mxu0 0.0
  %302 = vmatpush1.xpose.msra.mxu0 0.0
  %303 = vmatprep.subr.mxu0 0.0
  %304 = vmatpush1.xpose.msra.mxu0 0.0
  %305 = vmatprep.subr.mxu0 0.0
  %306 = vmatpush1.xpose.msra.mxu0 0.0
  %307 = vmatprep.subr.mxu0 0.0
  %308 = vmatpush1.xpose.msra.mxu0 0.0
  %309 = vmatprep.subr.mxu0 0.0
  %310 = vmatpush1.xpose.msra.mxu0 0.0
  %311 = vmatprep.subr.mxu0 0.0
  %312 = vmatpush1.xpose.msra.mxu0 0.0
  %313 = vmatprep.subr.mxu0 0.0
  %314 = vmatpush1.xpose.msra.mxu0 0.0
  %315 = vmatprep.subr.mxu0 0.0
  %316 = vmatpush1.xpose.msra.mxu0 0.0
  %317 = vmatprep.subr.mxu0 0.0
  %318 = vmatpush1.xpose.msra.mxu0 0.0
  %319 = vmatprep.subr.mxu0 0.0
  %320 = vmatpush1.xpose.msra.mxu0 0.0
  %321 = vmatprep.subr.mxu0 0.0
  %322 = vmatpush1.xpose.msra.mxu0 0.0
  %323 = vmatprep.subr.mxu0 0.0
  %324 = vmatpush1.xpose.msra.mxu0 0.0
  %325 = vmatprep.subr.mxu0 0.0
  %326 = vmatpush1.xpose.msra.mxu0 0.0
  %327 = vmatprep.subr.mxu0 0.0
  %328 = vmatpush1.xpose.msra.mxu0 0.0
  %329 = vmatprep.mubr.f32.mxu0 0.0
  %330 = vmatmul.mubr.f32.gmra.mrb[0].mxu0 %v263
  %v331 = vpop.f32.mrb[0].mxu0
  %v332 = vadd.f32 0.0, %v331
  %v333 = vpop.f32.mrb[0].mxu0
  %334 = vdwg.mxu0
  %336 = vset.pattern.permute.xlu0 0
  %337 = vperm.xlu0 %336, %v214
  %v338 = vpop.permute.xlu0 %337
  %341 = vset.pattern.permute.xlu0 0
  %342 = vperm.xlu0 %341, %v219
  %v343 = vpop.permute.xlu0 %342
  %v345 = vlaneseq
  %v346 = vshrl.u32 %v345, 7
  %v347 = vsub.s32 0, %v346
  %v348 = vrot.slane %v332, %v347
  %v349 = vadd.f32 %v338, %v348
  %v350 = vadd.f32 %v343, %v348
  %vm351 = vcmp.gt.f32.partialorder %v349, 0.0
  %vm352 = vcmp.gt.f32.partialorder %v350, 0.0
  %v353 = vmul.f32 %v349, 0.2
  %v354 = vmul.f32 %v350, 0.2
  %v355 = vsel %vm351, %v349, %v353
  %v356 = vsel %vm352, %v350, %v354
  %v357 = vadd.f32 %v355, %v37
  %v358 = vadd.f32 %v356, %v38
  %v359 = vsel %vm50, %v357, -inf
  %360 = vmax.xlane.f32.xlu0 %v359
  %v361 = vpop.xlane.xlu0 %360
  %v362 = vsel %vm50, %v358, -inf
  %363 = vmax.xlane.f32.xlu0 %v362
  %v364 = vpop.xlane.xlu0 %363
  %v365 = vsub.f32 %v357, %v361
  %v366 = vsub.f32 %v358, %v364
  %v367 = vmul.f32 %v365, 1.442695
  %v368 = vpow.pop %v367
  %v369 = vmul.f32 %v366, 1.442695
  %v370 = vpow.pop %v369
  %v371 = vsel %vm50, %v368, 0.0
  %372 = vadd.xlane.f32.xlu0 %v371
  %v373 = vpop.xlane.xlu0 %372
  %v374 = vsel %vm50, %v370, 0.0
  %375 = vadd.xlane.f32.xlu0 %v374
  %v376 = vpop.xlane.xlu0 %375
  %v378 = vsel %vm50, %v368, 0
  %v381 = vsel %vm50, %v370, 0
  %383 = vmatprep.subr.mxu0 0.0
  %384 = vmatpush1.msra.mxu0 %v124
  %385 = vmatprep.subr.mxu0 0.0
  %386 = vmatpush1.msra.mxu0 %v129
  %387 = vmatprep.subr.mxu0 0.0
  %388 = vmatpush1.msra.mxu0 0.0
  %389 = vmatprep.subr.mxu0 0.0
  %390 = vmatpush1.msra.mxu0 0.0
  %391 = vmatprep.subr.mxu0 0.0
  %392 = vmatpush1.msra.mxu0 0.0
  %393 = vmatprep.subr.mxu0 0.0
  %394 = vmatpush1.msra.mxu0 0.0
  %395 = vmatprep.subr.mxu0 0.0
  %396 = vmatpush1.msra.mxu0 0.0
  %397 = vmatprep.subr.mxu0 0.0
  %398 = vmatpush1.msra.mxu0 0.0
  %399 = vmatprep.subr.mxu0 0.0
  %400 = vmatpush1.msra.mxu0 0.0
  %401 = vmatprep.subr.mxu0 0.0
  %402 = vmatpush1.msra.mxu0 0.0
  %403 = vmatprep.subr.mxu0 0.0
  %404 = vmatpush1.msra.mxu0 0.0
  %405 = vmatprep.subr.mxu0 0.0
  %406 = vmatpush1.msra.mxu0 0.0
  %407 = vmatprep.subr.mxu0 0.0
  %408 = vmatpush1.msra.mxu0 0.0
  %409 = vmatprep.subr.mxu0 0.0
  %410 = vmatpush1.msra.mxu0 0.0
  %411 = vmatprep.subr.mxu0 0.0
  %412 = vmatpush1.msra.mxu0 0.0
  %413 = vmatprep.subr.mxu0 0.0
  %414 = vmatpush1.msra.mxu0 0.0
  %415 = vmatprep.subr.mxu0 0.0
  %416 = vmatpush1.msra.mxu0 0.0
  %417 = vmatprep.subr.mxu0 0.0
  %418 = vmatpush1.msra.mxu0 0.0
  %419 = vmatprep.subr.mxu0 0.0
  %420 = vmatpush1.msra.mxu0 0.0
  %421 = vmatprep.subr.mxu0 0.0
  %422 = vmatpush1.msra.mxu0 0.0
  %423 = vmatprep.subr.mxu0 0.0
  %424 = vmatpush1.msra.mxu0 0.0
  %425 = vmatprep.subr.mxu0 0.0
  %426 = vmatpush1.msra.mxu0 0.0
  %427 = vmatprep.subr.mxu0 0.0
  %428 = vmatpush1.msra.mxu0 0.0
  %429 = vmatprep.subr.mxu0 0.0
  %430 = vmatpush1.msra.mxu0 0.0
  %431 = vmatprep.subr.mxu0 0.0
  %432 = vmatpush1.msra.mxu0 0.0
  %433 = vmatprep.subr.mxu0 0.0
  %434 = vmatpush1.msra.mxu0 0.0
  %435 = vmatprep.subr.mxu0 0.0
  %436 = vmatpush1.msra.mxu0 0.0
  %437 = vmatprep.subr.mxu0 0.0
  %438 = vmatpush1.msra.mxu0 0.0
  %439 = vmatprep.subr.mxu0 0.0
  %440 = vmatpush1.msra.mxu0 0.0
  %441 = vmatprep.subr.mxu0 0.0
  %442 = vmatpush1.msra.mxu0 0.0
  %443 = vmatprep.subr.mxu0 0.0
  %444 = vmatpush1.msra.mxu0 0.0
  %445 = vmatprep.subr.mxu0 0.0
  %446 = vmatpush1.msra.mxu0 0.0
  %447 = vmatprep.mubr.f32.mxu0 0.0
  %448 = vmatmul.mubr.f32.gmra.mrb[0].mxu0 %v378
  %v449 = vpop.f32.mrb[0].mxu0
  %v450 = vadd.f32 0.0, %v449
  %v451 = vpop.f32.mrb[0].mxu0
  %452 = vmatprep.mubr.f32.mxu0 0.0
  %453 = vmatmul.mubr.f32.gmra.mrb[0].mxu0 %v381
  %v454 = vpop.f32.mrb[0].mxu0
  %v455 = vadd.f32 0.0, %v454
  %v456 = vpop.f32.mrb[0].mxu0
  %457 = vdwg.mxu0
  %v458 = vrcp.pop %v373
  %v459 = vrcp.pop %v376
  %v460 = vmul.f32 %v450, %v458
  %v461 = vmul.f32 %v455, %v459
  %v463 = vlaneseq
  %v464 = vshrl.u32 %v463, 7
  %v465 = vsub.s32 0, %v464
  %v466 = vrot.slane %v47, %v465
  %v468 = vadd.f32 %v460, %v466
  %v469 = vadd.f32 %v461, %v466
  %vm470 = vcmp.gt.f32.partialorder %v468, 0.0
  %vm471 = vcmp.gt.f32.partialorder %v469, 0.0
  %v472 = vmin.f32 %v468, 0.0
  %v473 = vmin.f32 %v469, 0.0
  %v474 = vmul.f32 %v472, 1.442695
  %v475 = vpow.pop %v474
  %v476 = vmul.f32 %v473, 1.442695
  %v477 = vpow.pop %v476
  %v478 = vsub.f32 %v475, 1.0
  %v479 = vsub.f32 %v477, 1.0
  %v480 = vsel %vm470, %v468, %v478
  %v481 = vsel %vm471, %v469, %v479
  %482 = vset.pattern.permute.xlu0 1
  %483 = vperm.xlu0 %482, %v214
  %v484 = vpop.permute.xlu0 %483
  %486 = vset.pattern.permute.xlu0 1
  %487 = vperm.xlu0 %486, %v219
  %v488 = vpop.permute.xlu0 %487
  %v490 = vlaneseq
  %v491 = vshrl.u32 %v490, 7
  %v492 = vsub.s32 1, %v491
  %v493 = vrot.slane %v332, %v492
  %v494 = vadd.f32 %v484, %v493
  %v495 = vadd.f32 %v488, %v493
  %vm496 = vcmp.gt.f32.partialorder %v494, 0.0
  %vm497 = vcmp.gt.f32.partialorder %v495, 0.0
  %v498 = vmul.f32 %v494, 0.2
  %v499 = vmul.f32 %v495, 0.2
  %v500 = vsel %vm496, %v494, %v498
  %v501 = vsel %vm497, %v495, %v499
  %v502 = vadd.f32 %v500, %v37
  %v503 = vadd.f32 %v501, %v38
  %v504 = vsel %vm50, %v502, -inf
  %505 = vmax.xlane.f32.xlu0 %v504
  %v506 = vpop.xlane.xlu0 %505
  %v507 = vsel %vm50, %v503, -inf
  %508 = vmax.xlane.f32.xlu0 %v507
  %v509 = vpop.xlane.xlu0 %508
  %v510 = vsub.f32 %v502, %v506
  %v511 = vsub.f32 %v503, %v509
  %v512 = vmul.f32 %v510, 1.442695
  %v513 = vpow.pop %v512
  %v514 = vmul.f32 %v511, 1.442695
  %v515 = vpow.pop %v514
  %v516 = vsel %vm50, %v513, 0.0
  %517 = vadd.xlane.f32.xlu0 %v516
  %v518 = vpop.xlane.xlu0 %517
  %v519 = vsel %vm50, %v515, 0.0
  %520 = vadd.xlane.f32.xlu0 %v519
  %v521 = vpop.xlane.xlu0 %520
  %522 = vrot.lane.b32.xlu0 %v124, 120
  %v523 = vpop.permute.xlu0 %522
  %524 = vrot.lane.b32.xlu0 %v129, 120
  %v525 = vpop.permute.xlu0 %524
  %v529 = vsel %vm50, %v513, 0
  %v532 = vsel %vm50, %v515, 0
  %534 = vmatprep.subr.mxu0 0.0
  %535 = vmatpush1.msra.mxu0 %v523
  %536 = vmatprep.subr.mxu0 0.0
  %537 = vmatpush1.msra.mxu0 %v525
  %538 = vmatprep.subr.mxu0 0.0
  %539 = vmatpush1.msra.mxu0 0.0
  %540 = vmatprep.subr.mxu0 0.0
  %541 = vmatpush1.msra.mxu0 0.0
  %542 = vmatprep.subr.mxu0 0.0
  %543 = vmatpush1.msra.mxu0 0.0
  %544 = vmatprep.subr.mxu0 0.0
  %545 = vmatpush1.msra.mxu0 0.0
  %546 = vmatprep.subr.mxu0 0.0
  %547 = vmatpush1.msra.mxu0 0.0
  %548 = vmatprep.subr.mxu0 0.0
  %549 = vmatpush1.msra.mxu0 0.0
  %550 = vmatprep.subr.mxu0 0.0
  %551 = vmatpush1.msra.mxu0 0.0
  %552 = vmatprep.subr.mxu0 0.0
  %553 = vmatpush1.msra.mxu0 0.0
  %554 = vmatprep.subr.mxu0 0.0
  %555 = vmatpush1.msra.mxu0 0.0
  %556 = vmatprep.subr.mxu0 0.0
  %557 = vmatpush1.msra.mxu0 0.0
  %558 = vmatprep.subr.mxu0 0.0
  %559 = vmatpush1.msra.mxu0 0.0
  %560 = vmatprep.subr.mxu0 0.0
  %561 = vmatpush1.msra.mxu0 0.0
  %562 = vmatprep.subr.mxu0 0.0
  %563 = vmatpush1.msra.mxu0 0.0
  %564 = vmatprep.subr.mxu0 0.0
  %565 = vmatpush1.msra.mxu0 0.0
  %566 = vmatprep.subr.mxu0 0.0
  %567 = vmatpush1.msra.mxu0 0.0
  %568 = vmatprep.subr.mxu0 0.0
  %569 = vmatpush1.msra.mxu0 0.0
  %570 = vmatprep.subr.mxu0 0.0
  %571 = vmatpush1.msra.mxu0 0.0
  %572 = vmatprep.subr.mxu0 0.0
  %573 = vmatpush1.msra.mxu0 0.0
  %574 = vmatprep.subr.mxu0 0.0
  %575 = vmatpush1.msra.mxu0 0.0
  %576 = vmatprep.subr.mxu0 0.0
  %577 = vmatpush1.msra.mxu0 0.0
  %578 = vmatprep.subr.mxu0 0.0
  %579 = vmatpush1.msra.mxu0 0.0
  %580 = vmatprep.subr.mxu0 0.0
  %581 = vmatpush1.msra.mxu0 0.0
  %582 = vmatprep.subr.mxu0 0.0
  %583 = vmatpush1.msra.mxu0 0.0
  %584 = vmatprep.subr.mxu0 0.0
  %585 = vmatpush1.msra.mxu0 0.0
  %586 = vmatprep.subr.mxu0 0.0
  %587 = vmatpush1.msra.mxu0 0.0
  %588 = vmatprep.subr.mxu0 0.0
  %589 = vmatpush1.msra.mxu0 0.0
  %590 = vmatprep.subr.mxu0 0.0
  %591 = vmatpush1.msra.mxu0 0.0
  %592 = vmatprep.subr.mxu0 0.0
  %593 = vmatpush1.msra.mxu0 0.0
  %594 = vmatprep.subr.mxu0 0.0
  %595 = vmatpush1.msra.mxu0 0.0
  %596 = vmatprep.subr.mxu0 0.0
  %597 = vmatpush1.msra.mxu0 0.0
  %598 = vmatprep.mubr.f32.mxu0 0.0
  %599 = vmatmul.mubr.f32.gmra.mrb[0].mxu0 %v529
  %v600 = vpop.f32.mrb[0].mxu0
  %v601 = vadd.f32 0.0, %v600
  %v602 = vpop.f32.mrb[0].mxu0
  %603 = vmatprep.mubr.f32.mxu0 0.0
  %604 = vmatmul.mubr.f32.gmra.mrb[0].mxu0 %v532
  %v605 = vpop.f32.mrb[0].mxu0
  %v606 = vadd.f32 0.0, %v605
  %v607 = vpop.f32.mrb[0].mxu0
  %608 = vdwg.mxu0
  %v609 = vrcp.pop %v518
  %v610 = vrcp.pop %v521
  %v611 = vmul.f32 %v601, %v609
  %v612 = vmul.f32 %v606, %v610
  %613 = vrot.lane.b32.xlu0 %v466, 120
  %v614 = vpop.permute.xlu0 %613
  %v616 = vadd.f32 %v611, %v614
  %v617 = vadd.f32 %v612, %v614
  %vm618 = vcmp.gt.f32.partialorder %v616, 0.0
  %vm619 = vcmp.gt.f32.partialorder %v617, 0.0
  %v620 = vmin.f32 %v616, 0.0
  %v621 = vmin.f32 %v617, 0.0
  %v622 = vmul.f32 %v620, 1.442695
  %v623 = vpow.pop %v622
  %v624 = vmul.f32 %v621, 1.442695
  %v625 = vpow.pop %v624
  %v626 = vsub.f32 %v623, 1.0
  %v627 = vsub.f32 %v625, 1.0
  %v628 = vsel %vm618, %v616, %v626
  %v629 = vsel %vm619, %v617, %v627
  %vm630 = vcmask 64512
  %v632 = vsel %vm630, %v628, 0
  %v635 = vsel %vm630, %v629, 0
  %637 = vmatprep.subr.mxu0 0.0
  %638 = vmatpush1.msra.mxu0 %v40
  %639 = vmatprep.subr.mxu0 0.0
  %640 = vmatpush1.msra.mxu0 0.0
  %641 = vmatprep.subr.mxu0 0.0
  %642 = vmatpush1.msra.mxu0 0.0
  %643 = vmatprep.subr.mxu0 0.0
  %644 = vmatpush1.msra.mxu0 0.0
  %645 = vmatprep.subr.mxu0 0.0
  %646 = vmatpush1.msra.mxu0 0.0
  %647 = vmatprep.subr.mxu0 0.0
  %648 = vmatpush1.msra.mxu0 0.0
  %649 = vmatprep.subr.mxu0 0.0
  %650 = vmatpush1.msra.mxu0 0.0
  %651 = vmatprep.subr.mxu0 0.0
  %652 = vmatpush1.msra.mxu0 0.0
  %653 = vmatprep.subr.mxu0 0.0
  %654 = vmatpush1.msra.mxu0 0.0
  %655 = vmatprep.subr.mxu0 0.0
  %656 = vmatpush1.msra.mxu0 0.0
  %657 = vmatprep.subr.mxu0 0.0
  %658 = vmatpush1.msra.mxu0 0.0
  %659 = vmatprep.subr.mxu0 0.0
  %660 = vmatpush1.msra.mxu0 0.0
  %661 = vmatprep.subr.mxu0 0.0
  %662 = vmatpush1.msra.mxu0 0.0
  %663 = vmatprep.subr.mxu0 0.0
  %664 = vmatpush1.msra.mxu0 0.0
  %665 = vmatprep.subr.mxu0 0.0
  %666 = vmatpush1.msra.mxu0 0.0
  %667 = vmatprep.subr.mxu0 0.0
  %668 = vmatpush1.msra.mxu0 0.0
  %669 = vmatprep.subr.mxu0 0.0
  %670 = vmatpush1.msra.mxu0 0.0
  %671 = vmatprep.subr.mxu0 0.0
  %672 = vmatpush1.msra.mxu0 0.0
  %673 = vmatprep.subr.mxu0 0.0
  %674 = vmatpush1.msra.mxu0 0.0
  %675 = vmatprep.subr.mxu0 0.0
  %676 = vmatpush1.msra.mxu0 0.0
  %677 = vmatprep.subr.mxu0 0.0
  %678 = vmatpush1.msra.mxu0 0.0
  %679 = vmatprep.subr.mxu0 0.0
  %680 = vmatpush1.msra.mxu0 0.0
  %681 = vmatprep.subr.mxu0 0.0
  %682 = vmatpush1.msra.mxu0 0.0
  %683 = vmatprep.subr.mxu0 0.0
  %684 = vmatpush1.msra.mxu0 0.0
  %685 = vmatprep.subr.mxu0 0.0
  %686 = vmatpush1.msra.mxu0 0.0
  %687 = vmatprep.subr.mxu0 0.0
  %688 = vmatpush1.msra.mxu0 0.0
  %689 = vmatprep.subr.mxu0 0.0
  %690 = vmatpush1.msra.mxu0 0.0
  %691 = vmatprep.subr.mxu0 0.0
  %692 = vmatpush1.msra.mxu0 0.0
  %693 = vmatprep.subr.mxu0 0.0
  %694 = vmatpush1.msra.mxu0 0.0
  %695 = vmatprep.subr.mxu0 0.0
  %696 = vmatpush1.msra.mxu0 0.0
  %697 = vmatprep.subr.mxu0 0.0
  %698 = vmatpush1.msra.mxu0 0.0
  %699 = vmatprep.subr.mxu0 0.0
  %700 = vmatpush1.msra.mxu0 0.0
  %701 = vmatprep.mubr.f32.mxu0 0.0
  %702 = vmatmul.mubr.f32.gmra.mrb[0].mxu0 %v632
  %v703 = vpop.f32.mrb[0].mxu0
  %v704 = vadd.f32 0.0, %v703
  %v705 = vpop.f32.mrb[0].mxu0
  %706 = vmatprep.mubr.f32.mxu0 0.0
  %707 = vmatmul.mubr.f32.gmra.mrb[0].mxu0 %v635
  %v708 = vpop.f32.mrb[0].mxu0
  %v709 = vadd.f32 0.0, %v708
  %v710 = vpop.f32.mrb[0].mxu0
  %711 = vdwg.mxu0
  %v713 = vsel %vm630, %v480, 0
  %v716 = vsel %vm630, %v481, 0
  %718 = vmatprep.subr.mxu0 0.0
  %719 = vmatpush1.msra.mxu0 %v39
  %720 = vmatprep.subr.mxu0 0.0
  %721 = vmatpush1.msra.mxu0 0.0
  %722 = vmatprep.subr.mxu0 0.0
  %723 = vmatpush1.msra.mxu0 0.0
  %724 = vmatprep.subr.mxu0 0.0
  %725 = vmatpush1.msra.mxu0 0.0
  %726 = vmatprep.subr.mxu0 0.0
  %727 = vmatpush1.msra.mxu0 0.0
  %728 = vmatprep.subr.mxu0 0.0
  %729 = vmatpush1.msra.mxu0 0.0
  %730 = vmatprep.subr.mxu0 0.0
  %731 = vmatpush1.msra.mxu0 0.0
  %732 = vmatprep.subr.mxu0 0.0
  %733 = vmatpush1.msra.mxu0 0.0
  %734 = vmatprep.subr.mxu0 0.0
  %735 = vmatpush1.msra.mxu0 0.0
  %736 = vmatprep.subr.mxu0 0.0
  %737 = vmatpush1.msra.mxu0 0.0
  %738 = vmatprep.subr.mxu0 0.0
  %739 = vmatpush1.msra.mxu0 0.0
  %740 = vmatprep.subr.mxu0 0.0
  %741 = vmatpush1.msra.mxu0 0.0
  %742 = vmatprep.subr.mxu0 0.0
  %743 = vmatpush1.msra.mxu0 0.0
  %744 = vmatprep.subr.mxu0 0.0
  %745 = vmatpush1.msra.mxu0 0.0
  %746 = vmatprep.subr.mxu0 0.0
  %747 = vmatpush1.msra.mxu0 0.0
  %748 = vmatprep.subr.mxu0 0.0
  %749 = vmatpush1.msra.mxu0 0.0
  %750 = vmatprep.subr.mxu0 0.0
  %751 = vmatpush1.msra.mxu0 0.0
  %752 = vmatprep.subr.mxu0 0.0
  %753 = vmatpush1.msra.mxu0 0.0
  %754 = vmatprep.subr.mxu0 0.0
  %755 = vmatpush1.msra.mxu0 0.0
  %756 = vmatprep.subr.mxu0 0.0
  %757 = vmatpush1.msra.mxu0 0.0
  %758 = vmatprep.subr.mxu0 0.0
  %759 = vmatpush1.msra.mxu0 0.0
  %760 = vmatprep.subr.mxu0 0.0
  %761 = vmatpush1.msra.mxu0 0.0
  %762 = vmatprep.subr.mxu0 0.0
  %763 = vmatpush1.msra.mxu0 0.0
  %764 = vmatprep.subr.mxu0 0.0
  %765 = vmatpush1.msra.mxu0 0.0
  %766 = vmatprep.subr.mxu0 0.0
  %767 = vmatpush1.msra.mxu0 0.0
  %768 = vmatprep.subr.mxu0 0.0
  %769 = vmatpush1.msra.mxu0 0.0
  %770 = vmatprep.subr.mxu0 0.0
  %771 = vmatpush1.msra.mxu0 0.0
  %772 = vmatprep.subr.mxu0 0.0
  %773 = vmatpush1.msra.mxu0 0.0
  %774 = vmatprep.subr.mxu0 0.0
  %775 = vmatpush1.msra.mxu0 0.0
  %776 = vmatprep.subr.mxu0 0.0
  %777 = vmatpush1.msra.mxu0 0.0
  %778 = vmatprep.subr.mxu0 0.0
  %779 = vmatpush1.msra.mxu0 0.0
  %780 = vmatprep.subr.mxu0 0.0
  %781 = vmatpush1.msra.mxu0 0.0
  %782 = vmatprep.mubr.f32.mxu0 0.0
  %783 = vmatmul.mubr.f32.gmra.mrb[0].mxu0 %v713
  %v784 = vpop.f32.mrb[0].mxu0
  %v785 = vadd.f32 %v704, %v784
  %v786 = vpop.f32.mrb[0].mxu0
  %787 = vmatprep.mubr.f32.mxu0 0.0
  %788 = vmatmul.mubr.f32.gmra.mrb[0].mxu0 %v716
  %v789 = vpop.f32.mrb[0].mxu0
  %v790 = vadd.f32 %v709, %v789
  %v791 = vpop.f32.mrb[0].mxu0
  %792 = vdwg.mxu0
  %793 = vset.pattern.permute.xlu0 2
  %794 = vperm.xlu0 %793, %v214
  %v795 = vpop.permute.xlu0 %794
  %797 = vset.pattern.permute.xlu0 2
  %798 = vperm.xlu0 %797, %v219
  %v799 = vpop.permute.xlu0 %798
  %v801 = vlaneseq
  %v802 = vshrl.u32 %v801, 7
  %v803 = vsub.s32 2, %v802
  %v804 = vrot.slane %v332, %v803
  %v805 = vadd.f32 %v795, %v804
  %v806 = vadd.f32 %v799, %v804
  %vm807 = vcmp.gt.f32.partialorder %v805, 0.0
  %vm808 = vcmp.gt.f32.partialorder %v806, 0.0
  %v809 = vmul.f32 %v805, 0.2
  %v810 = vmul.f32 %v806, 0.2
  %v811 = vsel %vm807, %v805, %v809
  %v812 = vsel %vm808, %v806, %v810
  %v813 = vadd.f32 %v811, %v37
  %v814 = vadd.f32 %v812, %v38
  %v815 = vsel %vm50, %v813, -inf
  %816 = vmax.xlane.f32.xlu0 %v815
  %v817 = vpop.xlane.xlu0 %816
  %v818 = vsel %vm50, %v814, -inf
  %819 = vmax.xlane.f32.xlu0 %v818
  %v820 = vpop.xlane.xlu0 %819
  %v821 = vsub.f32 %v813, %v817
  %v822 = vsub.f32 %v814, %v820
  %v823 = vmul.f32 %v821, 1.442695
  %v824 = vpow.pop %v823
  %v825 = vmul.f32 %v822, 1.442695
  %v826 = vpow.pop %v825
  %v827 = vsel %vm50, %v824, 0.0
  %828 = vadd.xlane.f32.xlu0 %v827
  %v829 = vpop.xlane.xlu0 %828
  %v830 = vsel %vm50, %v826, 0.0
  %831 = vadd.xlane.f32.xlu0 %v830
  %v832 = vpop.xlane.xlu0 %831
  %833 = vrot.lane.b32.xlu0 %v124, 112
  %v834 = vpop.permute.xlu0 %833
  %835 = vrot.lane.b32.xlu0 %v129, 112
  %v836 = vpop.permute.xlu0 %835
  %v840 = vsel %vm50, %v824, 0
  %v843 = vsel %vm50, %v826, 0
  %845 = vmatprep.subr.mxu0 0.0
  %846 = vmatpush1.msra.mxu0 %v834
  %847 = vmatprep.subr.mxu0 0.0
  %848 = vmatpush1.msra.mxu0 %v836
  %849 = vmatprep.subr.mxu0 0.0
  %850 = vmatpush1.msra.mxu0 0.0
  %851 = vmatprep.subr.mxu0 0.0
  %852 = vmatpush1.msra.mxu0 0.0
  %853 = vmatprep.subr.mxu0 0.0
  %854 = vmatpush1.msra.mxu0 0.0
  %855 = vmatprep.subr.mxu0 0.0
  %856 = vmatpush1.msra.mxu0 0.0
  %857 = vmatprep.subr.mxu0 0.0
  %858 = vmatpush1.msra.mxu0 0.0
  %859 = vmatprep.subr.mxu0 0.0
  %860 = vmatpush1.msra.mxu0 0.0
  %861 = vmatprep.subr.mxu0 0.0
  %862 = vmatpush1.msra.mxu0 0.0
  %863 = vmatprep.subr.mxu0 0.0
  %864 = vmatpush1.msra.mxu0 0.0
  %865 = vmatprep.subr.mxu0 0.0
  %866 = vmatpush1.msra.mxu0 0.0
  %867 = vmatprep.subr.mxu0 0.0
  %868 = vmatpush1.msra.mxu0 0.0
  %869 = vmatprep.subr.mxu0 0.0
  %870 = vmatpush1.msra.mxu0 0.0
  %871 = vmatprep.subr.mxu0 0.0
  %872 = vmatpush1.msra.mxu0 0.0
  %873 = vmatprep.subr.mxu0 0.0
  %874 = vmatpush1.msra.mxu0 0.0
  %875 = vmatprep.subr.mxu0 0.0
  %876 = vmatpush1.msra.mxu0 0.0
  %877 = vmatprep.subr.mxu0 0.0
  %878 = vmatpush1.msra.mxu0 0.0
  %879 = vmatprep.subr.mxu0 0.0
  %880 = vmatpush1.msra.mxu0 0.0
  %881 = vmatprep.subr.mxu0 0.0
  %882 = vmatpush1.msra.mxu0 0.0
  %883 = vmatprep.subr.mxu0 0.0
  %884 = vmatpush1.msra.mxu0 0.0
  %885 = vmatprep.subr.mxu0 0.0
  %886 = vmatpush1.msra.mxu0 0.0
  %887 = vmatprep.subr.mxu0 0.0
  %888 = vmatpush1.msra.mxu0 0.0
  %889 = vmatprep.subr.mxu0 0.0
  %890 = vmatpush1.msra.mxu0 0.0
  %891 = vmatprep.subr.mxu0 0.0
  %892 = vmatpush1.msra.mxu0 0.0
  %893 = vmatprep.subr.mxu0 0.0
  %894 = vmatpush1.msra.mxu0 0.0
  %895 = vmatprep.subr.mxu0 0.0
  %896 = vmatpush1.msra.mxu0 0.0
  %897 = vmatprep.subr.mxu0 0.0
  %898 = vmatpush1.msra.mxu0 0.0
  %899 = vmatprep.subr.mxu0 0.0
  %900 = vmatpush1.msra.mxu0 0.0
  %901 = vmatprep.subr.mxu0 0.0
  %902 = vmatpush1.msra.mxu0 0.0
  %903 = vmatprep.subr.mxu0 0.0
  %904 = vmatpush1.msra.mxu0 0.0
  %905 = vmatprep.subr.mxu0 0.0
  %906 = vmatpush1.msra.mxu0 0.0
  %907 = vmatprep.subr.mxu0 0.0
  %908 = vmatpush1.msra.mxu0 0.0
  %909 = vmatprep.mubr.f32.mxu0 0.0
  %910 = vmatmul.mubr.f32.gmra.mrb[0].mxu0 %v840
  %v911 = vpop.f32.mrb[0].mxu0
  %v912 = vadd.f32 0.0, %v911
  %v913 = vpop.f32.mrb[0].mxu0
  %914 = vmatprep.mubr.f32.mxu0 0.0
  %915 = vmatmul.mubr.f32.gmra.mrb[0].mxu0 %v843
  %v916 = vpop.f32.mrb[0].mxu0
  %v917 = vadd.f32 0.0, %v916
  %v918 = vpop.f32.mrb[0].mxu0
  %919 = vdwg.mxu0
  %v920 = vrcp.pop %v829
  %v921 = vrcp.pop %v832
  %v922 = vmul.f32 %v912, %v920
  %v923 = vmul.f32 %v917, %v921
  %924 = vrot.lane.b32.xlu0 %v466, 112
  %v925 = vpop.permute.xlu0 %924
  %v927 = vadd.f32 %v922, %v925
  %v928 = vadd.f32 %v923, %v925
  %vm929 = vcmp.gt.f32.partialorder %v927, 0.0
  %vm930 = vcmp.gt.f32.partialorder %v928, 0.0
  %v931 = vmin.f32 %v927, 0.0
  %v932 = vmin.f32 %v928, 0.0
  %v933 = vmul.f32 %v931, 1.442695
  %v934 = vpow.pop %v933
  %v935 = vmul.f32 %v932, 1.442695
  %v936 = vpow.pop %v935
  %v937 = vsub.f32 %v934, 1.0
  %v938 = vsub.f32 %v936, 1.0
  %v939 = vsel %vm929, %v927, %v937
  %v940 = vsel %vm930, %v928, %v938
  %v942 = vsel %vm630, %v939, 0
  %v945 = vsel %vm630, %v940, 0
  %947 = vmatprep.subr.mxu0 0.0
  %948 = vmatpush1.msra.mxu0 %v41
  %949 = vmatprep.subr.mxu0 0.0
  %950 = vmatpush1.msra.mxu0 0.0
  %951 = vmatprep.subr.mxu0 0.0
  %952 = vmatpush1.msra.mxu0 0.0
  %953 = vmatprep.subr.mxu0 0.0
  %954 = vmatpush1.msra.mxu0 0.0
  %955 = vmatprep.subr.mxu0 0.0
  %956 = vmatpush1.msra.mxu0 0.0
  %957 = vmatprep.subr.mxu0 0.0
  %958 = vmatpush1.msra.mxu0 0.0
  %959 = vmatprep.subr.mxu0 0.0
  %960 = vmatpush1.msra.mxu0 0.0
  %961 = vmatprep.subr.mxu0 0.0
  %962 = vmatpush1.msra.mxu0 0.0
  %963 = vmatprep.subr.mxu0 0.0
  %964 = vmatpush1.msra.mxu0 0.0
  %965 = vmatprep.subr.mxu0 0.0
  %966 = vmatpush1.msra.mxu0 0.0
  %967 = vmatprep.subr.mxu0 0.0
  %968 = vmatpush1.msra.mxu0 0.0
  %969 = vmatprep.subr.mxu0 0.0
  %970 = vmatpush1.msra.mxu0 0.0
  %971 = vmatprep.subr.mxu0 0.0
  %972 = vmatpush1.msra.mxu0 0.0
  %973 = vmatprep.subr.mxu0 0.0
  %974 = vmatpush1.msra.mxu0 0.0
  %975 = vmatprep.subr.mxu0 0.0
  %976 = vmatpush1.msra.mxu0 0.0
  %977 = vmatprep.subr.mxu0 0.0
  %978 = vmatpush1.msra.mxu0 0.0
  %979 = vmatprep.subr.mxu0 0.0
  %980 = vmatpush1.msra.mxu0 0.0
  %981 = vmatprep.subr.mxu0 0.0
  %982 = vmatpush1.msra.mxu0 0.0
  %983 = vmatprep.subr.mxu0 0.0
  %984 = vmatpush1.msra.mxu0 0.0
  %985 = vmatprep.subr.mxu0 0.0
  %986 = vmatpush1.msra.mxu0 0.0
  %987 = vmatprep.subr.mxu0 0.0
  %988 = vmatpush1.msra.mxu0 0.0
  %989 = vmatprep.subr.mxu0 0.0
  %990 = vmatpush1.msra.mxu0 0.0
  %991 = vmatprep.subr.mxu0 0.0
  %992 = vmatpush1.msra.mxu0 0.0
  %993 = vmatprep.subr.mxu0 0.0
  %994 = vmatpush1.msra.mxu0 0.0
  %995 = vmatprep.subr.mxu0 0.0
  %996 = vmatpush1.msra.mxu0 0.0
  %997 = vmatprep.subr.mxu0 0.0
  %998 = vmatpush1.msra.mxu0 0.0
  %999 = vmatprep.subr.mxu0 0.0
  %1000 = vmatpush1.msra.mxu0 0.0
  %1001 = vmatprep.subr.mxu0 0.0
  %1002 = vmatpush1.msra.mxu0 0.0
  %1003 = vmatprep.subr.mxu0 0.0
  %1004 = vmatpush1.msra.mxu0 0.0
  %1005 = vmatprep.subr.mxu0 0.0
  %1006 = vmatpush1.msra.mxu0 0.0
  %1007 = vmatprep.subr.mxu0 0.0
  %1008 = vmatpush1.msra.mxu0 0.0
  %1009 = vmatprep.subr.mxu0 0.0
  %1010 = vmatpush1.msra.mxu0 0.0
  %1011 = vmatprep.mubr.f32.mxu0 0.0
  %1012 = vmatmul.mubr.f32.gmra.mrb[0].mxu0 %v942
  %v1013 = vpop.f32.mrb[0].mxu0
  %v1014 = vadd.f32 0.0, %v1013
  %v1015 = vpop.f32.mrb[0].mxu0
  %1016 = vmatprep.mubr.f32.mxu0 0.0
  %1017 = vmatmul.mubr.f32.gmra.mrb[0].mxu0 %v945
  %v1018 = vpop.f32.mrb[0].mxu0
  %v1019 = vadd.f32 0.0, %v1018
  %v1020 = vpop.f32.mrb[0].mxu0
  %1021 = vdwg.mxu0
  %v1022 = vadd.f32 %v785, %v1014
  %v1023 = vadd.f32 %v790, %v1019
  %1024 = vset.pattern.permute.xlu0 3
  %1025 = vperm.xlu0 %1024, %v214
  %v1026 = vpop.permute.xlu0 %1025
  %1028 = vset.pattern.permute.xlu0 3
  %1029 = vperm.xlu0 %1028, %v219
  %v1030 = vpop.permute.xlu0 %1029
  %v1032 = vlaneseq
  %v1033 = vshrl.u32 %v1032, 7
  %v1034 = vsub.s32 3, %v1033
  %v1035 = vrot.slane %v332, %v1034
  %v1036 = vadd.f32 %v1026, %v1035
  %v1037 = vadd.f32 %v1030, %v1035
  %vm1038 = vcmp.gt.f32.partialorder %v1036, 0.0
  %vm1039 = vcmp.gt.f32.partialorder %v1037, 0.0
  %v1040 = vmul.f32 %v1036, 0.2
  %v1041 = vmul.f32 %v1037, 0.2
  %v1042 = vsel %vm1038, %v1036, %v1040
  %v1043 = vsel %vm1039, %v1037, %v1041
  %v1044 = vadd.f32 %v1042, %v37
  %v1045 = vadd.f32 %v1043, %v38
  %v1046 = vsel %vm50, %v1044, -inf
  %1047 = vmax.xlane.f32.xlu0 %v1046
  %v1048 = vpop.xlane.xlu0 %1047
  %v1049 = vsel %vm50, %v1045, -inf
  %1050 = vmax.xlane.f32.xlu0 %v1049
  %v1051 = vpop.xlane.xlu0 %1050
  %v1052 = vsub.f32 %v1044, %v1048
  %v1053 = vsub.f32 %v1045, %v1051
  %v1054 = vmul.f32 %v1052, 1.442695
  %v1055 = vpow.pop %v1054
  %v1056 = vmul.f32 %v1053, 1.442695
  %v1057 = vpow.pop %v1056
  %v1058 = vsel %vm50, %v1055, 0.0
  %1059 = vadd.xlane.f32.xlu0 %v1058
  %v1060 = vpop.xlane.xlu0 %1059
  %v1061 = vsel %vm50, %v1057, 0.0
  %1062 = vadd.xlane.f32.xlu0 %v1061
  %v1063 = vpop.xlane.xlu0 %1062
  %1064 = vrot.lane.b32.xlu0 %v124, 104
  %v1065 = vpop.permute.xlu0 %1064
  %1066 = vrot.lane.b32.xlu0 %v129, 104
  %v1067 = vpop.permute.xlu0 %1066
  %v1071 = vsel %vm50, %v1055, 0
  %v1074 = vsel %vm50, %v1057, 0
  %1076 = vmatprep.subr.mxu0 0.0
  %1077 = vmatpush1.msra.mxu0 %v1065
  %1078 = vmatprep.subr.mxu0 0.0
  %1079 = vmatpush1.msra.mxu0 %v1067
  %1080 = vmatprep.subr.mxu0 0.0
  %1081 = vmatpush1.msra.mxu0 0.0
  %1082 = vmatprep.subr.mxu0 0.0
  %1083 = vmatpush1.msra.mxu0 0.0
  %1084 = vmatprep.subr.mxu0 0.0
  %1085 = vmatpush1.msra.mxu0 0.0
  %1086 = vmatprep.subr.mxu0 0.0
  %1087 = vmatpush1.msra.mxu0 0.0
  %1088 = vmatprep.subr.mxu0 0.0
  %1089 = vmatpush1.msra.mxu0 0.0
  %1090 = vmatprep.subr.mxu0 0.0
  %1091 = vmatpush1.msra.mxu0 0.0
  %1092 = vmatprep.subr.mxu0 0.0
  %1093 = vmatpush1.msra.mxu0 0.0
  %1094 = vmatprep.subr.mxu0 0.0
  %1095 = vmatpush1.msra.mxu0 0.0
  %1096 = vmatprep.subr.mxu0 0.0
  %1097 = vmatpush1.msra.mxu0 0.0
  %1098 = vmatprep.subr.mxu0 0.0
  %1099 = vmatpush1.msra.mxu0 0.0
  %1100 = vmatprep.subr.mxu0 0.0
  %1101 = vmatpush1.msra.mxu0 0.0
  %1102 = vmatprep.subr.mxu0 0.0
  %1103 = vmatpush1.msra.mxu0 0.0
  %1104 = vmatprep.subr.mxu0 0.0
  %1105 = vmatpush1.msra.mxu0 0.0
  %1106 = vmatprep.subr.mxu0 0.0
  %1107 = vmatpush1.msra.mxu0 0.0
  %1108 = vmatprep.subr.mxu0 0.0
  %1109 = vmatpush1.msra.mxu0 0.0
  %1110 = vmatprep.subr.mxu0 0.0
  %1111 = vmatpush1.msra.mxu0 0.0
  %1112 = vmatprep.subr.mxu0 0.0
  %1113 = vmatpush1.msra.mxu0 0.0
  %1114 = vmatprep.subr.mxu0 0.0
  %1115 = vmatpush1.msra.mxu0 0.0
  %1116 = vmatprep.subr.mxu0 0.0
  %1117 = vmatpush1.msra.mxu0 0.0
  %1118 = vmatprep.subr.mxu0 0.0
  %1119 = vmatpush1.msra.mxu0 0.0
  %1120 = vmatprep.subr.mxu0 0.0
  %1121 = vmatpush1.msra.mxu0 0.0
  %1122 = vmatprep.subr.mxu0 0.0
  %1123 = vmatpush1.msra.mxu0 0.0
  %1124 = vmatprep.subr.mxu0 0.0
  %1125 = vmatpush1.msra.mxu0 0.0
  %1126 = vmatprep.subr.mxu0 0.0
  %1127 = vmatpush1.msra.mxu0 0.0
  %1128 = vmatprep.subr.mxu0 0.0
  %1129 = vmatpush1.msra.mxu0 0.0
  %1130 = vmatprep.subr.mxu0 0.0
  %1131 = vmatpush1.msra.mxu0 0.0
  %1132 = vmatprep.subr.mxu0 0.0
  %1133 = vmatpush1.msra.mxu0 0.0
  %1134 = vmatprep.subr.mxu0 0.0
  %1135 = vmatpush1.msra.mxu0 0.0
  %1136 = vmatprep.subr.mxu0 0.0
  %1137 = vmatpush1.msra.mxu0 0.0
  %1138 = vmatprep.subr.mxu0 0.0
  %1139 = vmatpush1.msra.mxu0 0.0
  %1140 = vmatprep.mubr.f32.mxu0 0.0
  %1141 = vmatmul.mubr.f32.gmra.mrb[0].mxu0 %v1071
  %v1142 = vpop.f32.mrb[0].mxu0
  %v1143 = vadd.f32 0.0, %v1142
  %v1144 = vpop.f32.mrb[0].mxu0
  %1145 = vmatprep.mubr.f32.mxu0 0.0
  %1146 = vmatmul.mubr.f32.gmra.mrb[0].mxu0 %v1074
  %v1147 = vpop.f32.mrb[0].mxu0
  %v1148 = vadd.f32 0.0, %v1147
  %v1149 = vpop.f32.mrb[0].mxu0
  %1150 = vdwg.mxu0
  %v1151 = vrcp.pop %v1060
  %v1152 = vrcp.pop %v1063
  %v1153 = vmul.f32 %v1143, %v1151
  %v1154 = vmul.f32 %v1148, %v1152
  %1155 = vrot.lane.b32.xlu0 %v466, 104
  %v1156 = vpop.permute.xlu0 %1155
  %v1158 = vadd.f32 %v1153, %v1156
  %v1159 = vadd.f32 %v1154, %v1156
  %vm1160 = vcmp.gt.f32.partialorder %v1158, 0.0
  %vm1161 = vcmp.gt.f32.partialorder %v1159, 0.0
  %v1162 = vmin.f32 %v1158, 0.0
  %v1163 = vmin.f32 %v1159, 0.0
  %v1164 = vmul.f32 %v1162, 1.442695
  %v1165 = vpow.pop %v1164
  %v1166 = vmul.f32 %v1163, 1.442695
  %v1167 = vpow.pop %v1166
  %v1168 = vsub.f32 %v1165, 1.0
  %v1169 = vsub.f32 %v1167, 1.0
  %v1170 = vsel %vm1160, %v1158, %v1168
  %v1171 = vsel %vm1161, %v1159, %v1169
  %v1173 = vsel %vm630, %v1170, 0
  %v1176 = vsel %vm630, %v1171, 0
  %1178 = vmatprep.subr.mxu0 0.0
  %1179 = vmatpush1.msra.mxu0 %v42
  %1180 = vmatprep.subr.mxu0 0.0
  %1181 = vmatpush1.msra.mxu0 0.0
  %1182 = vmatprep.subr.mxu0 0.0
  %1183 = vmatpush1.msra.mxu0 0.0
  %1184 = vmatprep.subr.mxu0 0.0
  %1185 = vmatpush1.msra.mxu0 0.0
  %1186 = vmatprep.subr.mxu0 0.0
  %1187 = vmatpush1.msra.mxu0 0.0
  %1188 = vmatprep.subr.mxu0 0.0
  %1189 = vmatpush1.msra.mxu0 0.0
  %1190 = vmatprep.subr.mxu0 0.0
  %1191 = vmatpush1.msra.mxu0 0.0
  %1192 = vmatprep.subr.mxu0 0.0
  %1193 = vmatpush1.msra.mxu0 0.0
  %1194 = vmatprep.subr.mxu0 0.0
  %1195 = vmatpush1.msra.mxu0 0.0
  %1196 = vmatprep.subr.mxu0 0.0
  %1197 = vmatpush1.msra.mxu0 0.0
  %1198 = vmatprep.subr.mxu0 0.0
  %1199 = vmatpush1.msra.mxu0 0.0
  %1200 = vmatprep.subr.mxu0 0.0
  %1201 = vmatpush1.msra.mxu0 0.0
  %1202 = vmatprep.subr.mxu0 0.0
  %1203 = vmatpush1.msra.mxu0 0.0
  %1204 = vmatprep.subr.mxu0 0.0
  %1205 = vmatpush1.msra.mxu0 0.0
  %1206 = vmatprep.subr.mxu0 0.0
  %1207 = vmatpush1.msra.mxu0 0.0
  %1208 = vmatprep.subr.mxu0 0.0
  %1209 = vmatpush1.msra.mxu0 0.0
  %1210 = vmatprep.subr.mxu0 0.0
  %1211 = vmatpush1.msra.mxu0 0.0
  %1212 = vmatprep.subr.mxu0 0.0
  %1213 = vmatpush1.msra.mxu0 0.0
  %1214 = vmatprep.subr.mxu0 0.0
  %1215 = vmatpush1.msra.mxu0 0.0
  %1216 = vmatprep.subr.mxu0 0.0
  %1217 = vmatpush1.msra.mxu0 0.0
  %1218 = vmatprep.subr.mxu0 0.0
  %1219 = vmatpush1.msra.mxu0 0.0
  %1220 = vmatprep.subr.mxu0 0.0
  %1221 = vmatpush1.msra.mxu0 0.0
  %1222 = vmatprep.subr.mxu0 0.0
  %1223 = vmatpush1.msra.mxu0 0.0
  %1224 = vmatprep.subr.mxu0 0.0
  %1225 = vmatpush1.msra.mxu0 0.0
  %1226 = vmatprep.subr.mxu0 0.0
  %1227 = vmatpush1.msra.mxu0 0.0
  %1228 = vmatprep.subr.mxu0 0.0
  %1229 = vmatpush1.msra.mxu0 0.0
  %1230 = vmatprep.subr.mxu0 0.0
  %1231 = vmatpush1.msra.mxu0 0.0
  %1232 = vmatprep.subr.mxu0 0.0
  %1233 = vmatpush1.msra.mxu0 0.0
  %1234 = vmatprep.subr.mxu0 0.0
  %1235 = vmatpush1.msra.mxu0 0.0
  %1236 = vmatprep.subr.mxu0 0.0
  %1237 = vmatpush1.msra.mxu0 0.0
  %1238 = vmatprep.subr.mxu0 0.0
  %1239 = vmatpush1.msra.mxu0 0.0
  %1240 = vmatprep.subr.mxu0 0.0
  %1241 = vmatpush1.msra.mxu0 0.0
  %1242 = vmatprep.mubr.f32.mxu0 0.0
  %1243 = vmatmul.mubr.f32.gmra.mrb[0].mxu0 %v1173
  %v1244 = vpop.f32.mrb[0].mxu0
  %v1245 = vadd.f32 0.0, %v1244
  %v1246 = vpop.f32.mrb[0].mxu0
  %1247 = vmatprep.mubr.f32.mxu0 0.0
  %1248 = vmatmul.mubr.f32.gmra.mrb[0].mxu0 %v1176
  %v1249 = vpop.f32.mrb[0].mxu0
  %v1250 = vadd.f32 0.0, %v1249
  %v1251 = vpop.f32.mrb[0].mxu0
  %1252 = vdwg.mxu0
  %v1253 = vadd.f32 %v1022, %v1245
  %v1254 = vadd.f32 %v1023, %v1250
  %1255 = vset.pattern.permute.xlu0 4
  %1256 = vperm.xlu0 %1255, %v214
  %v1257 = vpop.permute.xlu0 %1256
  %1259 = vset.pattern.permute.xlu0 4
  %1260 = vperm.xlu0 %1259, %v219
  %v1261 = vpop.permute.xlu0 %1260
  %v1263 = vlaneseq
  %v1264 = vshrl.u32 %v1263, 7
  %v1265 = vsub.s32 4, %v1264
  %v1266 = vrot.slane %v332, %v1265
  %v1267 = vadd.f32 %v1257, %v1266
  %v1268 = vadd.f32 %v1261, %v1266
  %vm1269 = vcmp.gt.f32.partialorder %v1267, 0.0
  %vm1270 = vcmp.gt.f32.partialorder %v1268, 0.0
  %v1271 = vmul.f32 %v1267, 0.2
  %v1272 = vmul.f32 %v1268, 0.2
  %v1273 = vsel %vm1269, %v1267, %v1271
  %v1274 = vsel %vm1270, %v1268, %v1272
  %v1275 = vadd.f32 %v1273, %v37
  %v1276 = vadd.f32 %v1274, %v38
  %v1277 = vsel %vm50, %v1275, -inf
  %1278 = vmax.xlane.f32.xlu0 %v1277
  %v1279 = vpop.xlane.xlu0 %1278
  %v1280 = vsel %vm50, %v1276, -inf
  %1281 = vmax.xlane.f32.xlu0 %v1280
  %v1282 = vpop.xlane.xlu0 %1281
  %v1283 = vsub.f32 %v1275, %v1279
  %v1284 = vsub.f32 %v1276, %v1282
  %v1285 = vmul.f32 %v1283, 1.442695
  %v1286 = vpow.pop %v1285
  %v1287 = vmul.f32 %v1284, 1.442695
  %v1288 = vpow.pop %v1287
  %v1289 = vsel %vm50, %v1286, 0.0
  %1290 = vadd.xlane.f32.xlu0 %v1289
  %v1291 = vpop.xlane.xlu0 %1290
  %v1292 = vsel %vm50, %v1288, 0.0
  %1293 = vadd.xlane.f32.xlu0 %v1292
  %v1294 = vpop.xlane.xlu0 %1293
  %1295 = vrot.lane.b32.xlu0 %v124, 96
  %v1296 = vpop.permute.xlu0 %1295
  %1297 = vrot.lane.b32.xlu0 %v129, 96
  %v1298 = vpop.permute.xlu0 %1297
  %v1302 = vsel %vm50, %v1286, 0
  %v1305 = vsel %vm50, %v1288, 0
  %1307 = vmatprep.subr.mxu0 0.0
  %1308 = vmatpush1.msra.mxu0 %v1296
  %1309 = vmatprep.subr.mxu0 0.0
  %1310 = vmatpush1.msra.mxu0 %v1298
  %1311 = vmatprep.subr.mxu0 0.0
  %1312 = vmatpush1.msra.mxu0 0.0
  %1313 = vmatprep.subr.mxu0 0.0
  %1314 = vmatpush1.msra.mxu0 0.0
  %1315 = vmatprep.subr.mxu0 0.0
  %1316 = vmatpush1.msra.mxu0 0.0
  %1317 = vmatprep.subr.mxu0 0.0
  %1318 = vmatpush1.msra.mxu0 0.0
  %1319 = vmatprep.subr.mxu0 0.0
  %1320 = vmatpush1.msra.mxu0 0.0
  %1321 = vmatprep.subr.mxu0 0.0
  %1322 = vmatpush1.msra.mxu0 0.0
  %1323 = vmatprep.subr.mxu0 0.0
  %1324 = vmatpush1.msra.mxu0 0.0
  %1325 = vmatprep.subr.mxu0 0.0
  %1326 = vmatpush1.msra.mxu0 0.0
  %1327 = vmatprep.subr.mxu0 0.0
  %1328 = vmatpush1.msra.mxu0 0.0
  %1329 = vmatprep.subr.mxu0 0.0
  %1330 = vmatpush1.msra.mxu0 0.0
  %1331 = vmatprep.subr.mxu0 0.0
  %1332 = vmatpush1.msra.mxu0 0.0
  %1333 = vmatprep.subr.mxu0 0.0
  %1334 = vmatpush1.msra.mxu0 0.0
  %1335 = vmatprep.subr.mxu0 0.0
  %1336 = vmatpush1.msra.mxu0 0.0
  %1337 = vmatprep.subr.mxu0 0.0
  %1338 = vmatpush1.msra.mxu0 0.0
  %1339 = vmatprep.subr.mxu0 0.0
  %1340 = vmatpush1.msra.mxu0 0.0
  %1341 = vmatprep.subr.mxu0 0.0
  %1342 = vmatpush1.msra.mxu0 0.0
  %1343 = vmatprep.subr.mxu0 0.0
  %1344 = vmatpush1.msra.mxu0 0.0
  %1345 = vmatprep.subr.mxu0 0.0
  %1346 = vmatpush1.msra.mxu0 0.0
  %1347 = vmatprep.subr.mxu0 0.0
  %1348 = vmatpush1.msra.mxu0 0.0
  %1349 = vmatprep.subr.mxu0 0.0
  %1350 = vmatpush1.msra.mxu0 0.0
  %1351 = vmatprep.subr.mxu0 0.0
  %1352 = vmatpush1.msra.mxu0 0.0
  %1353 = vmatprep.subr.mxu0 0.0
  %1354 = vmatpush1.msra.mxu0 0.0
  %1355 = vmatprep.subr.mxu0 0.0
  %1356 = vmatpush1.msra.mxu0 0.0
  %1357 = vmatprep.subr.mxu0 0.0
  %1358 = vmatpush1.msra.mxu0 0.0
  %1359 = vmatprep.subr.mxu0 0.0
  %1360 = vmatpush1.msra.mxu0 0.0
  %1361 = vmatprep.subr.mxu0 0.0
  %1362 = vmatpush1.msra.mxu0 0.0
  %1363 = vmatprep.subr.mxu0 0.0
  %1364 = vmatpush1.msra.mxu0 0.0
  %1365 = vmatprep.subr.mxu0 0.0
  %1366 = vmatpush1.msra.mxu0 0.0
  %1367 = vmatprep.subr.mxu0 0.0
  %1368 = vmatpush1.msra.mxu0 0.0
  %1369 = vmatprep.subr.mxu0 0.0
  %1370 = vmatpush1.msra.mxu0 0.0
  %1371 = vmatprep.mubr.f32.mxu0 0.0
  %1372 = vmatmul.mubr.f32.gmra.mrb[0].mxu0 %v1302
  %v1373 = vpop.f32.mrb[0].mxu0
  %v1374 = vadd.f32 0.0, %v1373
  %v1375 = vpop.f32.mrb[0].mxu0
  %1376 = vmatprep.mubr.f32.mxu0 0.0
  %1377 = vmatmul.mubr.f32.gmra.mrb[0].mxu0 %v1305
  %v1378 = vpop.f32.mrb[0].mxu0
  %v1379 = vadd.f32 0.0, %v1378
  %v1380 = vpop.f32.mrb[0].mxu0
  %1381 = vdwg.mxu0
  %v1382 = vrcp.pop %v1291
  %v1383 = vrcp.pop %v1294
  %v1384 = vmul.f32 %v1374, %v1382
  %v1385 = vmul.f32 %v1379, %v1383
  %1386 = vrot.lane.b32.xlu0 %v466, 96
  %v1387 = vpop.permute.xlu0 %1386
  %v1389 = vadd.f32 %v1384, %v1387
  %v1390 = vadd.f32 %v1385, %v1387
  %vm1391 = vcmp.gt.f32.partialorder %v1389, 0.0
  %vm1392 = vcmp.gt.f32.partialorder %v1390, 0.0
  %v1393 = vmin.f32 %v1389, 0.0
  %v1394 = vmin.f32 %v1390, 0.0
  %v1395 = vmul.f32 %v1393, 1.442695
  %v1396 = vpow.pop %v1395
  %v1397 = vmul.f32 %v1394, 1.442695
  %v1398 = vpow.pop %v1397
  %v1399 = vsub.f32 %v1396, 1.0
  %v1400 = vsub.f32 %v1398, 1.0
  %v1401 = vsel %vm1391, %v1389, %v1399
  %v1402 = vsel %vm1392, %v1390, %v1400
  %v1404 = vsel %vm630, %v1401, 0
  %v1407 = vsel %vm630, %v1402, 0
  %1409 = vmatprep.subr.mxu0 0.0
  %1410 = vmatpush1.msra.mxu0 %v43
  %1411 = vmatprep.subr.mxu0 0.0
  %1412 = vmatpush1.msra.mxu0 0.0
  %1413 = vmatprep.subr.mxu0 0.0
  %1414 = vmatpush1.msra.mxu0 0.0
  %1415 = vmatprep.subr.mxu0 0.0
  %1416 = vmatpush1.msra.mxu0 0.0
  %1417 = vmatprep.subr.mxu0 0.0
  %1418 = vmatpush1.msra.mxu0 0.0
  %1419 = vmatprep.subr.mxu0 0.0
  %1420 = vmatpush1.msra.mxu0 0.0
  %1421 = vmatprep.subr.mxu0 0.0
  %1422 = vmatpush1.msra.mxu0 0.0
  %1423 = vmatprep.subr.mxu0 0.0
  %1424 = vmatpush1.msra.mxu0 0.0
  %1425 = vmatprep.subr.mxu0 0.0
  %1426 = vmatpush1.msra.mxu0 0.0
  %1427 = vmatprep.subr.mxu0 0.0
  %1428 = vmatpush1.msra.mxu0 0.0
  %1429 = vmatprep.subr.mxu0 0.0
  %1430 = vmatpush1.msra.mxu0 0.0
  %1431 = vmatprep.subr.mxu0 0.0
  %1432 = vmatpush1.msra.mxu0 0.0
  %1433 = vmatprep.subr.mxu0 0.0
  %1434 = vmatpush1.msra.mxu0 0.0
  %1435 = vmatprep.subr.mxu0 0.0
  %1436 = vmatpush1.msra.mxu0 0.0
  %1437 = vmatprep.subr.mxu0 0.0
  %1438 = vmatpush1.msra.mxu0 0.0
  %1439 = vmatprep.subr.mxu0 0.0
  %1440 = vmatpush1.msra.mxu0 0.0
  %1441 = vmatprep.subr.mxu0 0.0
  %1442 = vmatpush1.msra.mxu0 0.0
  %1443 = vmatprep.subr.mxu0 0.0
  %1444 = vmatpush1.msra.mxu0 0.0
  %1445 = vmatprep.subr.mxu0 0.0
  %1446 = vmatpush1.msra.mxu0 0.0
  %1447 = vmatprep.subr.mxu0 0.0
  %1448 = vmatpush1.msra.mxu0 0.0
  %1449 = vmatprep.subr.mxu0 0.0
  %1450 = vmatpush1.msra.mxu0 0.0
  %1451 = vmatprep.subr.mxu0 0.0
  %1452 = vmatpush1.msra.mxu0 0.0
  %1453 = vmatprep.subr.mxu0 0.0
  %1454 = vmatpush1.msra.mxu0 0.0
  %1455 = vmatprep.subr.mxu0 0.0
  %1456 = vmatpush1.msra.mxu0 0.0
  %1457 = vmatprep.subr.mxu0 0.0
  %1458 = vmatpush1.msra.mxu0 0.0
  %1459 = vmatprep.subr.mxu0 0.0
  %1460 = vmatpush1.msra.mxu0 0.0
  %1461 = vmatprep.subr.mxu0 0.0
  %1462 = vmatpush1.msra.mxu0 0.0
  %1463 = vmatprep.subr.mxu0 0.0
  %1464 = vmatpush1.msra.mxu0 0.0
  %1465 = vmatprep.subr.mxu0 0.0
  %1466 = vmatpush1.msra.mxu0 0.0
  %1467 = vmatprep.subr.mxu0 0.0
  %1468 = vmatpush1.msra.mxu0 0.0
  %1469 = vmatprep.subr.mxu0 0.0
  %1470 = vmatpush1.msra.mxu0 0.0
  %1471 = vmatprep.subr.mxu0 0.0
  %1472 = vmatpush1.msra.mxu0 0.0
  %1473 = vmatprep.mubr.f32.mxu0 0.0
  %1474 = vmatmul.mubr.f32.gmra.mrb[0].mxu0 %v1404
  %v1475 = vpop.f32.mrb[0].mxu0
  %v1476 = vadd.f32 0.0, %v1475
  %v1477 = vpop.f32.mrb[0].mxu0
  %1478 = vmatprep.mubr.f32.mxu0 0.0
  %1479 = vmatmul.mubr.f32.gmra.mrb[0].mxu0 %v1407
  %v1480 = vpop.f32.mrb[0].mxu0
  %v1481 = vadd.f32 0.0, %v1480
  %v1482 = vpop.f32.mrb[0].mxu0
  %1483 = vdwg.mxu0
  %v1484 = vadd.f32 %v1253, %v1476
  %v1485 = vadd.f32 %v1254, %v1481
  %1486 = vset.pattern.permute.xlu0 5
  %1487 = vperm.xlu0 %1486, %v214
  %v1488 = vpop.permute.xlu0 %1487
  %1490 = vset.pattern.permute.xlu0 5
  %1491 = vperm.xlu0 %1490, %v219
  %v1492 = vpop.permute.xlu0 %1491
  %v1494 = vlaneseq
  %v1495 = vshrl.u32 %v1494, 7
  %v1496 = vsub.s32 5, %v1495
  %v1497 = vrot.slane %v332, %v1496
  %v1498 = vadd.f32 %v1488, %v1497
  %v1499 = vadd.f32 %v1492, %v1497
  %vm1500 = vcmp.gt.f32.partialorder %v1498, 0.0
  %vm1501 = vcmp.gt.f32.partialorder %v1499, 0.0
  %v1502 = vmul.f32 %v1498, 0.2
  %v1503 = vmul.f32 %v1499, 0.2
  %v1504 = vsel %vm1500, %v1498, %v1502
  %v1505 = vsel %vm1501, %v1499, %v1503
  %v1506 = vadd.f32 %v1504, %v37
  %v1507 = vadd.f32 %v1505, %v38
  %v1508 = vsel %vm50, %v1506, -inf
  %1509 = vmax.xlane.f32.xlu0 %v1508
  %v1510 = vpop.xlane.xlu0 %1509
  %v1511 = vsel %vm50, %v1507, -inf
  %1512 = vmax.xlane.f32.xlu0 %v1511
  %v1513 = vpop.xlane.xlu0 %1512
  %v1514 = vsub.f32 %v1506, %v1510
  %v1515 = vsub.f32 %v1507, %v1513
  %v1516 = vmul.f32 %v1514, 1.442695
  %v1517 = vpow.pop %v1516
  %v1518 = vmul.f32 %v1515, 1.442695
  %v1519 = vpow.pop %v1518
  %v1520 = vsel %vm50, %v1517, 0.0
  %1521 = vadd.xlane.f32.xlu0 %v1520
  %v1522 = vpop.xlane.xlu0 %1521
  %v1523 = vsel %vm50, %v1519, 0.0
  %1524 = vadd.xlane.f32.xlu0 %v1523
  %v1525 = vpop.xlane.xlu0 %1524
  %1526 = vrot.lane.b32.xlu0 %v124, 88
  %v1527 = vpop.permute.xlu0 %1526
  %1528 = vrot.lane.b32.xlu0 %v129, 88
  %v1529 = vpop.permute.xlu0 %1528
  %v1533 = vsel %vm50, %v1517, 0
  %v1536 = vsel %vm50, %v1519, 0
  %1538 = vmatprep.subr.mxu0 0.0
  %1539 = vmatpush1.msra.mxu0 %v1527
  %1540 = vmatprep.subr.mxu0 0.0
  %1541 = vmatpush1.msra.mxu0 %v1529
  %1542 = vmatprep.subr.mxu0 0.0
  %1543 = vmatpush1.msra.mxu0 0.0
  %1544 = vmatprep.subr.mxu0 0.0
  %1545 = vmatpush1.msra.mxu0 0.0
  %1546 = vmatprep.subr.mxu0 0.0
  %1547 = vmatpush1.msra.mxu0 0.0
  %1548 = vmatprep.subr.mxu0 0.0
  %1549 = vmatpush1.msra.mxu0 0.0
  %1550 = vmatprep.subr.mxu0 0.0
  %1551 = vmatpush1.msra.mxu0 0.0
  %1552 = vmatprep.subr.mxu0 0.0
  %1553 = vmatpush1.msra.mxu0 0.0
  %1554 = vmatprep.subr.mxu0 0.0
  %1555 = vmatpush1.msra.mxu0 0.0
  %1556 = vmatprep.subr.mxu0 0.0
  %1557 = vmatpush1.msra.mxu0 0.0
  %1558 = vmatprep.subr.mxu0 0.0
  %1559 = vmatpush1.msra.mxu0 0.0
  %1560 = vmatprep.subr.mxu0 0.0
  %1561 = vmatpush1.msra.mxu0 0.0
  %1562 = vmatprep.subr.mxu0 0.0
  %1563 = vmatpush1.msra.mxu0 0.0
  %1564 = vmatprep.subr.mxu0 0.0
  %1565 = vmatpush1.msra.mxu0 0.0
  %1566 = vmatprep.subr.mxu0 0.0
  %1567 = vmatpush1.msra.mxu0 0.0
  %1568 = vmatprep.subr.mxu0 0.0
  %1569 = vmatpush1.msra.mxu0 0.0
  %1570 = vmatprep.subr.mxu0 0.0
  %1571 = vmatpush1.msra.mxu0 0.0
  %1572 = vmatprep.subr.mxu0 0.0
  %1573 = vmatpush1.msra.mxu0 0.0
  %1574 = vmatprep.subr.mxu0 0.0
  %1575 = vmatpush1.msra.mxu0 0.0
  %1576 = vmatprep.subr.mxu0 0.0
  %1577 = vmatpush1.msra.mxu0 0.0
  %1578 = vmatprep.subr.mxu0 0.0
  %1579 = vmatpush1.msra.mxu0 0.0
  %1580 = vmatprep.subr.mxu0 0.0
  %1581 = vmatpush1.msra.mxu0 0.0
  %1582 = vmatprep.subr.mxu0 0.0
  %1583 = vmatpush1.msra.mxu0 0.0
  %1584 = vmatprep.subr.mxu0 0.0
  %1585 = vmatpush1.msra.mxu0 0.0
  %1586 = vmatprep.subr.mxu0 0.0
  %1587 = vmatpush1.msra.mxu0 0.0
  %1588 = vmatprep.subr.mxu0 0.0
  %1589 = vmatpush1.msra.mxu0 0.0
  %1590 = vmatprep.subr.mxu0 0.0
  %1591 = vmatpush1.msra.mxu0 0.0
  %1592 = vmatprep.subr.mxu0 0.0
  %1593 = vmatpush1.msra.mxu0 0.0
  %1594 = vmatprep.subr.mxu0 0.0
  %1595 = vmatpush1.msra.mxu0 0.0
  %1596 = vmatprep.subr.mxu0 0.0
  %1597 = vmatpush1.msra.mxu0 0.0
  %1598 = vmatprep.subr.mxu0 0.0
  %1599 = vmatpush1.msra.mxu0 0.0
  %1600 = vmatprep.subr.mxu0 0.0
  %1601 = vmatpush1.msra.mxu0 0.0
  %1602 = vmatprep.mubr.f32.mxu0 0.0
  %1603 = vmatmul.mubr.f32.gmra.mrb[0].mxu0 %v1533
  %v1604 = vpop.f32.mrb[0].mxu0
  %v1605 = vadd.f32 0.0, %v1604
  %v1606 = vpop.f32.mrb[0].mxu0
  %1607 = vmatprep.mubr.f32.mxu0 0.0
  %1608 = vmatmul.mubr.f32.gmra.mrb[0].mxu0 %v1536
  %v1609 = vpop.f32.mrb[0].mxu0
  %v1610 = vadd.f32 0.0, %v1609
  %v1611 = vpop.f32.mrb[0].mxu0
  %1612 = vdwg.mxu0
  %v1613 = vrcp.pop %v1522
  %v1614 = vrcp.pop %v1525
  %v1615 = vmul.f32 %v1605, %v1613
  %v1616 = vmul.f32 %v1610, %v1614
  %1617 = vrot.lane.b32.xlu0 %v466, 88
  %v1618 = vpop.permute.xlu0 %1617
  %v1620 = vadd.f32 %v1615, %v1618
  %v1621 = vadd.f32 %v1616, %v1618
  %vm1622 = vcmp.gt.f32.partialorder %v1620, 0.0
  %vm1623 = vcmp.gt.f32.partialorder %v1621, 0.0
  %v1624 = vmin.f32 %v1620, 0.0
  %v1625 = vmin.f32 %v1621, 0.0
  %v1626 = vmul.f32 %v1624, 1.442695
  %v1627 = vpow.pop %v1626
  %v1628 = vmul.f32 %v1625, 1.442695
  %v1629 = vpow.pop %v1628
  %v1630 = vsub.f32 %v1627, 1.0
  %v1631 = vsub.f32 %v1629, 1.0
  %v1632 = vsel %vm1622, %v1620, %v1630
  %v1633 = vsel %vm1623, %v1621, %v1631
  %v1635 = vsel %vm630, %v1632, 0
  %v1638 = vsel %vm630, %v1633, 0
  %1640 = vmatprep.subr.mxu0 0.0
  %1641 = vmatpush1.msra.mxu0 %v44
  %1642 = vmatprep.subr.mxu0 0.0
  %1643 = vmatpush1.msra.mxu0 0.0
  %1644 = vmatprep.subr.mxu0 0.0
  %1645 = vmatpush1.msra.mxu0 0.0
  %1646 = vmatprep.subr.mxu0 0.0
  %1647 = vmatpush1.msra.mxu0 0.0
  %1648 = vmatprep.subr.mxu0 0.0
  %1649 = vmatpush1.msra.mxu0 0.0
  %1650 = vmatprep.subr.mxu0 0.0
  %1651 = vmatpush1.msra.mxu0 0.0
  %1652 = vmatprep.subr.mxu0 0.0
  %1653 = vmatpush1.msra.mxu0 0.0
  %1654 = vmatprep.subr.mxu0 0.0
  %1655 = vmatpush1.msra.mxu0 0.0
  %1656 = vmatprep.subr.mxu0 0.0
  %1657 = vmatpush1.msra.mxu0 0.0
  %1658 = vmatprep.subr.mxu0 0.0
  %1659 = vmatpush1.msra.mxu0 0.0
  %1660 = vmatprep.subr.mxu0 0.0
  %1661 = vmatpush1.msra.mxu0 0.0
  %1662 = vmatprep.subr.mxu0 0.0
  %1663 = vmatpush1.msra.mxu0 0.0
  %1664 = vmatprep.subr.mxu0 0.0
  %1665 = vmatpush1.msra.mxu0 0.0
  %1666 = vmatprep.subr.mxu0 0.0
  %1667 = vmatpush1.msra.mxu0 0.0
  %1668 = vmatprep.subr.mxu0 0.0
  %1669 = vmatpush1.msra.mxu0 0.0
  %1670 = vmatprep.subr.mxu0 0.0
  %1671 = vmatpush1.msra.mxu0 0.0
  %1672 = vmatprep.subr.mxu0 0.0
  %1673 = vmatpush1.msra.mxu0 0.0
  %1674 = vmatprep.subr.mxu0 0.0
  %1675 = vmatpush1.msra.mxu0 0.0
  %1676 = vmatprep.subr.mxu0 0.0
  %1677 = vmatpush1.msra.mxu0 0.0
  %1678 = vmatprep.subr.mxu0 0.0
  %1679 = vmatpush1.msra.mxu0 0.0
  %1680 = vmatprep.subr.mxu0 0.0
  %1681 = vmatpush1.msra.mxu0 0.0
  %1682 = vmatprep.subr.mxu0 0.0
  %1683 = vmatpush1.msra.mxu0 0.0
  %1684 = vmatprep.subr.mxu0 0.0
  %1685 = vmatpush1.msra.mxu0 0.0
  %1686 = vmatprep.subr.mxu0 0.0
  %1687 = vmatpush1.msra.mxu0 0.0
  %1688 = vmatprep.subr.mxu0 0.0
  %1689 = vmatpush1.msra.mxu0 0.0
  %1690 = vmatprep.subr.mxu0 0.0
  %1691 = vmatpush1.msra.mxu0 0.0
  %1692 = vmatprep.subr.mxu0 0.0
  %1693 = vmatpush1.msra.mxu0 0.0
  %1694 = vmatprep.subr.mxu0 0.0
  %1695 = vmatpush1.msra.mxu0 0.0
  %1696 = vmatprep.subr.mxu0 0.0
  %1697 = vmatpush1.msra.mxu0 0.0
  %1698 = vmatprep.subr.mxu0 0.0
  %1699 = vmatpush1.msra.mxu0 0.0
  %1700 = vmatprep.subr.mxu0 0.0
  %1701 = vmatpush1.msra.mxu0 0.0
  %1702 = vmatprep.subr.mxu0 0.0
  %1703 = vmatpush1.msra.mxu0 0.0
  %1704 = vmatprep.mubr.f32.mxu0 0.0
  %1705 = vmatmul.mubr.f32.gmra.mrb[0].mxu0 %v1635
  %v1706 = vpop.f32.mrb[0].mxu0
  %v1707 = vadd.f32 0.0, %v1706
  %v1708 = vpop.f32.mrb[0].mxu0
  %1709 = vmatprep.mubr.f32.mxu0 0.0
  %1710 = vmatmul.mubr.f32.gmra.mrb[0].mxu0 %v1638
  %v1711 = vpop.f32.mrb[0].mxu0
  %v1712 = vadd.f32 0.0, %v1711
  %v1713 = vpop.f32.mrb[0].mxu0
  %1714 = vdwg.mxu0
  %v1715 = vadd.f32 %v1484, %v1707
  %v1716 = vadd.f32 %v1485, %v1712
  %1717 = vset.pattern.permute.xlu0 6
  %1718 = vperm.xlu0 %1717, %v214
  %v1719 = vpop.permute.xlu0 %1718
  %1721 = vset.pattern.permute.xlu0 6
  %1722 = vperm.xlu0 %1721, %v219
  %v1723 = vpop.permute.xlu0 %1722
  %v1725 = vlaneseq
  %v1726 = vshrl.u32 %v1725, 7
  %v1727 = vsub.s32 6, %v1726
  %v1728 = vrot.slane %v332, %v1727
  %v1729 = vadd.f32 %v1719, %v1728
  %v1730 = vadd.f32 %v1723, %v1728
  %vm1731 = vcmp.gt.f32.partialorder %v1729, 0.0
  %vm1732 = vcmp.gt.f32.partialorder %v1730, 0.0
  %v1733 = vmul.f32 %v1729, 0.2
  %v1734 = vmul.f32 %v1730, 0.2
  %v1735 = vsel %vm1731, %v1729, %v1733
  %v1736 = vsel %vm1732, %v1730, %v1734
  %v1737 = vadd.f32 %v1735, %v37
  %v1738 = vadd.f32 %v1736, %v38
  %v1739 = vsel %vm50, %v1737, -inf
  %1740 = vmax.xlane.f32.xlu0 %v1739
  %v1741 = vpop.xlane.xlu0 %1740
  %v1742 = vsel %vm50, %v1738, -inf
  %1743 = vmax.xlane.f32.xlu0 %v1742
  %v1744 = vpop.xlane.xlu0 %1743
  %v1745 = vsub.f32 %v1737, %v1741
  %v1746 = vsub.f32 %v1738, %v1744
  %v1747 = vmul.f32 %v1745, 1.442695
  %v1748 = vpow.pop %v1747
  %v1749 = vmul.f32 %v1746, 1.442695
  %v1750 = vpow.pop %v1749
  %v1751 = vsel %vm50, %v1748, 0.0
  %1752 = vadd.xlane.f32.xlu0 %v1751
  %v1753 = vpop.xlane.xlu0 %1752
  %v1754 = vsel %vm50, %v1750, 0.0
  %1755 = vadd.xlane.f32.xlu0 %v1754
  %v1756 = vpop.xlane.xlu0 %1755
  %1757 = vrot.lane.b32.xlu0 %v124, 80
  %v1758 = vpop.permute.xlu0 %1757
  %1759 = vrot.lane.b32.xlu0 %v129, 80
  %v1760 = vpop.permute.xlu0 %1759
  %v1764 = vsel %vm50, %v1748, 0
  %v1767 = vsel %vm50, %v1750, 0
  %1769 = vmatprep.subr.mxu0 0.0
  %1770 = vmatpush1.msra.mxu0 %v1758
  %1771 = vmatprep.subr.mxu0 0.0
  %1772 = vmatpush1.msra.mxu0 %v1760
  %1773 = vmatprep.subr.mxu0 0.0
  %1774 = vmatpush1.msra.mxu0 0.0
  %1775 = vmatprep.subr.mxu0 0.0
  %1776 = vmatpush1.msra.mxu0 0.0
  %1777 = vmatprep.subr.mxu0 0.0
  %1778 = vmatpush1.msra.mxu0 0.0
  %1779 = vmatprep.subr.mxu0 0.0
  %1780 = vmatpush1.msra.mxu0 0.0
  %1781 = vmatprep.subr.mxu0 0.0
  %1782 = vmatpush1.msra.mxu0 0.0
  %1783 = vmatprep.subr.mxu0 0.0
  %1784 = vmatpush1.msra.mxu0 0.0
  %1785 = vmatprep.subr.mxu0 0.0
  %1786 = vmatpush1.msra.mxu0 0.0
  %1787 = vmatprep.subr.mxu0 0.0
  %1788 = vmatpush1.msra.mxu0 0.0
  %1789 = vmatprep.subr.mxu0 0.0
  %1790 = vmatpush1.msra.mxu0 0.0
  %1791 = vmatprep.subr.mxu0 0.0
  %1792 = vmatpush1.msra.mxu0 0.0
  %1793 = vmatprep.subr.mxu0 0.0
  %1794 = vmatpush1.msra.mxu0 0.0
  %1795 = vmatprep.subr.mxu0 0.0
  %1796 = vmatpush1.msra.mxu0 0.0
  %1797 = vmatprep.subr.mxu0 0.0
  %1798 = vmatpush1.msra.mxu0 0.0
  %1799 = vmatprep.subr.mxu0 0.0
  %1800 = vmatpush1.msra.mxu0 0.0
  %1801 = vmatprep.subr.mxu0 0.0
  %1802 = vmatpush1.msra.mxu0 0.0
  %1803 = vmatprep.subr.mxu0 0.0
  %1804 = vmatpush1.msra.mxu0 0.0
  %1805 = vmatprep.subr.mxu0 0.0
  %1806 = vmatpush1.msra.mxu0 0.0
  %1807 = vmatprep.subr.mxu0 0.0
  %1808 = vmatpush1.msra.mxu0 0.0
  %1809 = vmatprep.subr.mxu0 0.0
  %1810 = vmatpush1.msra.mxu0 0.0
  %1811 = vmatprep.subr.mxu0 0.0
  %1812 = vmatpush1.msra.mxu0 0.0
  %1813 = vmatprep.subr.mxu0 0.0
  %1814 = vmatpush1.msra.mxu0 0.0
  %1815 = vmatprep.subr.mxu0 0.0
  %1816 = vmatpush1.msra.mxu0 0.0
  %1817 = vmatprep.subr.mxu0 0.0
  %1818 = vmatpush1.msra.mxu0 0.0
  %1819 = vmatprep.subr.mxu0 0.0
  %1820 = vmatpush1.msra.mxu0 0.0
  %1821 = vmatprep.subr.mxu0 0.0
  %1822 = vmatpush1.msra.mxu0 0.0
  %1823 = vmatprep.subr.mxu0 0.0
  %1824 = vmatpush1.msra.mxu0 0.0
  %1825 = vmatprep.subr.mxu0 0.0
  %1826 = vmatpush1.msra.mxu0 0.0
  %1827 = vmatprep.subr.mxu0 0.0
  %1828 = vmatpush1.msra.mxu0 0.0
  %1829 = vmatprep.subr.mxu0 0.0
  %1830 = vmatpush1.msra.mxu0 0.0
  %1831 = vmatprep.subr.mxu0 0.0
  %1832 = vmatpush1.msra.mxu0 0.0
  %1833 = vmatprep.mubr.f32.mxu0 0.0
  %1834 = vmatmul.mubr.f32.gmra.mrb[0].mxu0 %v1764
  %v1835 = vpop.f32.mrb[0].mxu0
  %v1836 = vadd.f32 0.0, %v1835
  %v1837 = vpop.f32.mrb[0].mxu0
  %1838 = vmatprep.mubr.f32.mxu0 0.0
  %1839 = vmatmul.mubr.f32.gmra.mrb[0].mxu0 %v1767
  %v1840 = vpop.f32.mrb[0].mxu0
  %v1841 = vadd.f32 0.0, %v1840
  %v1842 = vpop.f32.mrb[0].mxu0
  %1843 = vdwg.mxu0
  %v1844 = vrcp.pop %v1753
  %v1845 = vrcp.pop %v1756
  %v1846 = vmul.f32 %v1836, %v1844
  %v1847 = vmul.f32 %v1841, %v1845
  %1848 = vrot.lane.b32.xlu0 %v466, 80
  %v1849 = vpop.permute.xlu0 %1848
  %v1851 = vadd.f32 %v1846, %v1849
  %v1852 = vadd.f32 %v1847, %v1849
  %vm1853 = vcmp.gt.f32.partialorder %v1851, 0.0
  %vm1854 = vcmp.gt.f32.partialorder %v1852, 0.0
  %v1855 = vmin.f32 %v1851, 0.0
  %v1856 = vmin.f32 %v1852, 0.0
  %v1857 = vmul.f32 %v1855, 1.442695
  %v1858 = vpow.pop %v1857
  %v1859 = vmul.f32 %v1856, 1.442695
  %v1860 = vpow.pop %v1859
  %v1861 = vsub.f32 %v1858, 1.0
  %v1862 = vsub.f32 %v1860, 1.0
  %v1863 = vsel %vm1853, %v1851, %v1861
  %v1864 = vsel %vm1854, %v1852, %v1862
  %v1866 = vsel %vm630, %v1863, 0
  %v1869 = vsel %vm630, %v1864, 0
  %1871 = vmatprep.subr.mxu0 0.0
  %1872 = vmatpush1.msra.mxu0 %v45
  %1873 = vmatprep.subr.mxu0 0.0
  %1874 = vmatpush1.msra.mxu0 0.0
  %1875 = vmatprep.subr.mxu0 0.0
  %1876 = vmatpush1.msra.mxu0 0.0
  %1877 = vmatprep.subr.mxu0 0.0
  %1878 = vmatpush1.msra.mxu0 0.0
  %1879 = vmatprep.subr.mxu0 0.0
  %1880 = vmatpush1.msra.mxu0 0.0
  %1881 = vmatprep.subr.mxu0 0.0
  %1882 = vmatpush1.msra.mxu0 0.0
  %1883 = vmatprep.subr.mxu0 0.0
  %1884 = vmatpush1.msra.mxu0 0.0
  %1885 = vmatprep.subr.mxu0 0.0
  %1886 = vmatpush1.msra.mxu0 0.0
  %1887 = vmatprep.subr.mxu0 0.0
  %1888 = vmatpush1.msra.mxu0 0.0
  %1889 = vmatprep.subr.mxu0 0.0
  %1890 = vmatpush1.msra.mxu0 0.0
  %1891 = vmatprep.subr.mxu0 0.0
  %1892 = vmatpush1.msra.mxu0 0.0
  %1893 = vmatprep.subr.mxu0 0.0
  %1894 = vmatpush1.msra.mxu0 0.0
  %1895 = vmatprep.subr.mxu0 0.0
  %1896 = vmatpush1.msra.mxu0 0.0
  %1897 = vmatprep.subr.mxu0 0.0
  %1898 = vmatpush1.msra.mxu0 0.0
  %1899 = vmatprep.subr.mxu0 0.0
  %1900 = vmatpush1.msra.mxu0 0.0
  %1901 = vmatprep.subr.mxu0 0.0
  %1902 = vmatpush1.msra.mxu0 0.0
  %1903 = vmatprep.subr.mxu0 0.0
  %1904 = vmatpush1.msra.mxu0 0.0
  %1905 = vmatprep.subr.mxu0 0.0
  %1906 = vmatpush1.msra.mxu0 0.0
  %1907 = vmatprep.subr.mxu0 0.0
  %1908 = vmatpush1.msra.mxu0 0.0
  %1909 = vmatprep.subr.mxu0 0.0
  %1910 = vmatpush1.msra.mxu0 0.0
  %1911 = vmatprep.subr.mxu0 0.0
  %1912 = vmatpush1.msra.mxu0 0.0
  %1913 = vmatprep.subr.mxu0 0.0
  %1914 = vmatpush1.msra.mxu0 0.0
  %1915 = vmatprep.subr.mxu0 0.0
  %1916 = vmatpush1.msra.mxu0 0.0
  %1917 = vmatprep.subr.mxu0 0.0
  %1918 = vmatpush1.msra.mxu0 0.0
  %1919 = vmatprep.subr.mxu0 0.0
  %1920 = vmatpush1.msra.mxu0 0.0
  %1921 = vmatprep.subr.mxu0 0.0
  %1922 = vmatpush1.msra.mxu0 0.0
  %1923 = vmatprep.subr.mxu0 0.0
  %1924 = vmatpush1.msra.mxu0 0.0
  %1925 = vmatprep.subr.mxu0 0.0
  %1926 = vmatpush1.msra.mxu0 0.0
  %1927 = vmatprep.subr.mxu0 0.0
  %1928 = vmatpush1.msra.mxu0 0.0
  %1929 = vmatprep.subr.mxu0 0.0
  %1930 = vmatpush1.msra.mxu0 0.0
  %1931 = vmatprep.subr.mxu0 0.0
  %1932 = vmatpush1.msra.mxu0 0.0
  %1933 = vmatprep.subr.mxu0 0.0
  %1934 = vmatpush1.msra.mxu0 0.0
  %1935 = vmatprep.mubr.f32.mxu0 0.0
  %1936 = vmatmul.mubr.f32.gmra.mrb[0].mxu0 %v1866
  %v1937 = vpop.f32.mrb[0].mxu0
  %v1938 = vadd.f32 0.0, %v1937
  %v1939 = vpop.f32.mrb[0].mxu0
  %1940 = vmatprep.mubr.f32.mxu0 0.0
  %1941 = vmatmul.mubr.f32.gmra.mrb[0].mxu0 %v1869
  %v1942 = vpop.f32.mrb[0].mxu0
  %v1943 = vadd.f32 0.0, %v1942
  %v1944 = vpop.f32.mrb[0].mxu0
  %1945 = vdwg.mxu0
  %v1946 = vadd.f32 %v1715, %v1938
  %v1947 = vadd.f32 %v1716, %v1943
  %1948 = vset.pattern.permute.xlu0 7
  %1949 = vperm.xlu0 %1948, %v214
  %v1950 = vpop.permute.xlu0 %1949
  %1952 = vset.pattern.permute.xlu0 7
  %1953 = vperm.xlu0 %1952, %v219
  %v1954 = vpop.permute.xlu0 %1953
  %v1956 = vlaneseq
  %v1957 = vshrl.u32 %v1956, 7
  %v1958 = vsub.s32 7, %v1957
  %v1959 = vrot.slane %v332, %v1958
  %v1960 = vadd.f32 %v1950, %v1959
  %v1961 = vadd.f32 %v1954, %v1959
  %vm1962 = vcmp.gt.f32.partialorder %v1960, 0.0
  %vm1963 = vcmp.gt.f32.partialorder %v1961, 0.0
  %v1964 = vmul.f32 %v1960, 0.2
  %v1965 = vmul.f32 %v1961, 0.2
  %v1966 = vsel %vm1962, %v1960, %v1964
  %v1967 = vsel %vm1963, %v1961, %v1965
  %v1968 = vadd.f32 %v1966, %v37
  %v1969 = vadd.f32 %v1967, %v38
  %v1970 = vsel %vm50, %v1968, -inf
  %1971 = vmax.xlane.f32.xlu0 %v1970
  %v1972 = vpop.xlane.xlu0 %1971
  %v1973 = vsel %vm50, %v1969, -inf
  %1974 = vmax.xlane.f32.xlu0 %v1973
  %v1975 = vpop.xlane.xlu0 %1974
  %v1976 = vsub.f32 %v1968, %v1972
  %v1977 = vsub.f32 %v1969, %v1975
  %v1978 = vmul.f32 %v1976, 1.442695
  %v1979 = vpow.pop %v1978
  %v1980 = vmul.f32 %v1977, 1.442695
  %v1981 = vpow.pop %v1980
  %v1982 = vsel %vm50, %v1979, 0.0
  %1983 = vadd.xlane.f32.xlu0 %v1982
  %v1984 = vpop.xlane.xlu0 %1983
  %v1985 = vsel %vm50, %v1981, 0.0
  %1986 = vadd.xlane.f32.xlu0 %v1985
  %v1987 = vpop.xlane.xlu0 %1986
  %1988 = vrot.lane.b32.xlu0 %v124, 72
  %v1989 = vpop.permute.xlu0 %1988
  %1990 = vrot.lane.b32.xlu0 %v129, 72
  %v1991 = vpop.permute.xlu0 %1990
  %v1995 = vsel %vm50, %v1979, 0
  %v1998 = vsel %vm50, %v1981, 0
  %2000 = vmatprep.subr.mxu0 0.0
  %2001 = vmatpush1.msra.mxu0 %v1989
  %2002 = vmatprep.subr.mxu0 0.0
  %2003 = vmatpush1.msra.mxu0 %v1991
  %2004 = vmatprep.subr.mxu0 0.0
  %2005 = vmatpush1.msra.mxu0 0.0
  %2006 = vmatprep.subr.mxu0 0.0
  %2007 = vmatpush1.msra.mxu0 0.0
  %2008 = vmatprep.subr.mxu0 0.0
  %2009 = vmatpush1.msra.mxu0 0.0
  %2010 = vmatprep.subr.mxu0 0.0
  %2011 = vmatpush1.msra.mxu0 0.0
  %2012 = vmatprep.subr.mxu0 0.0
  %2013 = vmatpush1.msra.mxu0 0.0
  %2014 = vmatprep.subr.mxu0 0.0
  %2015 = vmatpush1.msra.mxu0 0.0
  %2016 = vmatprep.subr.mxu0 0.0
  %2017 = vmatpush1.msra.mxu0 0.0
  %2018 = vmatprep.subr.mxu0 0.0
  %2019 = vmatpush1.msra.mxu0 0.0
  %2020 = vmatprep.subr.mxu0 0.0
  %2021 = vmatpush1.msra.mxu0 0.0
  %2022 = vmatprep.subr.mxu0 0.0
  %2023 = vmatpush1.msra.mxu0 0.0
  %2024 = vmatprep.subr.mxu0 0.0
  %2025 = vmatpush1.msra.mxu0 0.0
  %2026 = vmatprep.subr.mxu0 0.0
  %2027 = vmatpush1.msra.mxu0 0.0
  %2028 = vmatprep.subr.mxu0 0.0
  %2029 = vmatpush1.msra.mxu0 0.0
  %2030 = vmatprep.subr.mxu0 0.0
  %2031 = vmatpush1.msra.mxu0 0.0
  %2032 = vmatprep.subr.mxu0 0.0
  %2033 = vmatpush1.msra.mxu0 0.0
  %2034 = vmatprep.subr.mxu0 0.0
  %2035 = vmatpush1.msra.mxu0 0.0
  %2036 = vmatprep.subr.mxu0 0.0
  %2037 = vmatpush1.msra.mxu0 0.0
  %2038 = vmatprep.subr.mxu0 0.0
  %2039 = vmatpush1.msra.mxu0 0.0
  %2040 = vmatprep.subr.mxu0 0.0
  %2041 = vmatpush1.msra.mxu0 0.0
  %2042 = vmatprep.subr.mxu0 0.0
  %2043 = vmatpush1.msra.mxu0 0.0
  %2044 = vmatprep.subr.mxu0 0.0
  %2045 = vmatpush1.msra.mxu0 0.0
  %2046 = vmatprep.subr.mxu0 0.0
  %2047 = vmatpush1.msra.mxu0 0.0
  %2048 = vmatprep.subr.mxu0 0.0
  %2049 = vmatpush1.msra.mxu0 0.0
  %2050 = vmatprep.subr.mxu0 0.0
  %2051 = vmatpush1.msra.mxu0 0.0
  %2052 = vmatprep.subr.mxu0 0.0
  %2053 = vmatpush1.msra.mxu0 0.0
  %2054 = vmatprep.subr.mxu0 0.0
  %2055 = vmatpush1.msra.mxu0 0.0
  %2056 = vmatprep.subr.mxu0 0.0
  %2057 = vmatpush1.msra.mxu0 0.0
  %2058 = vmatprep.subr.mxu0 0.0
  %2059 = vmatpush1.msra.mxu0 0.0
  %2060 = vmatprep.subr.mxu0 0.0
  %2061 = vmatpush1.msra.mxu0 0.0
  %2062 = vmatprep.subr.mxu0 0.0
  %2063 = vmatpush1.msra.mxu0 0.0
  %2064 = vmatprep.mubr.f32.mxu0 0.0
  %2065 = vmatmul.mubr.f32.gmra.mrb[0].mxu0 %v1995
  %v2066 = vpop.f32.mrb[0].mxu0
  %v2067 = vadd.f32 0.0, %v2066
  %v2068 = vpop.f32.mrb[0].mxu0
  %2069 = vmatprep.mubr.f32.mxu0 0.0
  %2070 = vmatmul.mubr.f32.gmra.mrb[0].mxu0 %v1998
  %v2071 = vpop.f32.mrb[0].mxu0
  %v2072 = vadd.f32 0.0, %v2071
  %v2073 = vpop.f32.mrb[0].mxu0
  %2074 = vdwg.mxu0
  %v2075 = vrcp.pop %v1984
  %v2076 = vrcp.pop %v1987
  %v2077 = vmul.f32 %v2067, %v2075
  %v2078 = vmul.f32 %v2072, %v2076
  %2079 = vrot.lane.b32.xlu0 %v466, 72
  %v2080 = vpop.permute.xlu0 %2079
  %v2082 = vadd.f32 %v2077, %v2080
  %v2083 = vadd.f32 %v2078, %v2080
  %vm2084 = vcmp.gt.f32.partialorder %v2082, 0.0
  %vm2085 = vcmp.gt.f32.partialorder %v2083, 0.0
  %v2086 = vmin.f32 %v2082, 0.0
  %v2087 = vmin.f32 %v2083, 0.0
  %v2088 = vmul.f32 %v2086, 1.442695
  %v2089 = vpow.pop %v2088
  %v2090 = vmul.f32 %v2087, 1.442695
  %v2091 = vpow.pop %v2090
  %v2092 = vsub.f32 %v2089, 1.0
  %v2093 = vsub.f32 %v2091, 1.0
  %v2094 = vsel %vm2084, %v2082, %v2092
  %v2095 = vsel %vm2085, %v2083, %v2093
  %v2097 = vsel %vm630, %v2094, 0
  %v2100 = vsel %vm630, %v2095, 0
  %2102 = vmatprep.subr.mxu0 0.0
  %2103 = vmatpush1.msra.mxu0 %v46
  %2104 = vmatprep.subr.mxu0 0.0
  %2105 = vmatpush1.msra.mxu0 0.0
  %2106 = vmatprep.subr.mxu0 0.0
  %2107 = vmatpush1.msra.mxu0 0.0
  %2108 = vmatprep.subr.mxu0 0.0
  %2109 = vmatpush1.msra.mxu0 0.0
  %2110 = vmatprep.subr.mxu0 0.0
  %2111 = vmatpush1.msra.mxu0 0.0
  %2112 = vmatprep.subr.mxu0 0.0
  %2113 = vmatpush1.msra.mxu0 0.0
  %2114 = vmatprep.subr.mxu0 0.0
  %2115 = vmatpush1.msra.mxu0 0.0
  %2116 = vmatprep.subr.mxu0 0.0
  %2117 = vmatpush1.msra.mxu0 0.0
  %2118 = vmatprep.subr.mxu0 0.0
  %2119 = vmatpush1.msra.mxu0 0.0
  %2120 = vmatprep.subr.mxu0 0.0
  %2121 = vmatpush1.msra.mxu0 0.0
  %2122 = vmatprep.subr.mxu0 0.0
  %2123 = vmatpush1.msra.mxu0 0.0
  %2124 = vmatprep.subr.mxu0 0.0
  %2125 = vmatpush1.msra.mxu0 0.0
  %2126 = vmatprep.subr.mxu0 0.0
  %2127 = vmatpush1.msra.mxu0 0.0
  %2128 = vmatprep.subr.mxu0 0.0
  %2129 = vmatpush1.msra.mxu0 0.0
  %2130 = vmatprep.subr.mxu0 0.0
  %2131 = vmatpush1.msra.mxu0 0.0
  %2132 = vmatprep.subr.mxu0 0.0
  %2133 = vmatpush1.msra.mxu0 0.0
  %2134 = vmatprep.subr.mxu0 0.0
  %2135 = vmatpush1.msra.mxu0 0.0
  %2136 = vmatprep.subr.mxu0 0.0
  %2137 = vmatpush1.msra.mxu0 0.0
  %2138 = vmatprep.subr.mxu0 0.0
  %2139 = vmatpush1.msra.mxu0 0.0
  %2140 = vmatprep.subr.mxu0 0.0
  %2141 = vmatpush1.msra.mxu0 0.0
  %2142 = vmatprep.subr.mxu0 0.0
  %2143 = vmatpush1.msra.mxu0 0.0
  %2144 = vmatprep.subr.mxu0 0.0
  %2145 = vmatpush1.msra.mxu0 0.0
  %2146 = vmatprep.subr.mxu0 0.0
  %2147 = vmatpush1.msra.mxu0 0.0
  %2148 = vmatprep.subr.mxu0 0.0
  %2149 = vmatpush1.msra.mxu0 0.0
  %2150 = vmatprep.subr.mxu0 0.0
  %2151 = vmatpush1.msra.mxu0 0.0
  %2152 = vmatprep.subr.mxu0 0.0
  %2153 = vmatpush1.msra.mxu0 0.0
  %2154 = vmatprep.subr.mxu0 0.0
  %2155 = vmatpush1.msra.mxu0 0.0
  %2156 = vmatprep.subr.mxu0 0.0
  %2157 = vmatpush1.msra.mxu0 0.0
  %2158 = vmatprep.subr.mxu0 0.0
  %2159 = vmatpush1.msra.mxu0 0.0
  %2160 = vmatprep.subr.mxu0 0.0
  %2161 = vmatpush1.msra.mxu0 0.0
  %2162 = vmatprep.subr.mxu0 0.0
  %2163 = vmatpush1.msra.mxu0 0.0
  %2164 = vmatprep.subr.mxu0 0.0
  %2165 = vmatpush1.msra.mxu0 0.0
  %2166 = vmatprep.mubr.f32.mxu0 0.0
  %2167 = vmatmul.mubr.f32.gmra.mrb[0].mxu0 %v2097
  %v2168 = vpop.f32.mrb[0].mxu0
  %v2169 = vadd.f32 0.0, %v2168
  %v2170 = vpop.f32.mrb[0].mxu0
  %2171 = vmatprep.mubr.f32.mxu0 0.0
  %2172 = vmatmul.mubr.f32.gmra.mrb[0].mxu0 %v2100
  %v2173 = vpop.f32.mrb[0].mxu0
  %v2174 = vadd.f32 0.0, %v2173
  %v2175 = vpop.f32.mrb[0].mxu0
  %2176 = vdwg.mxu0
  %v2177 = vadd.f32 %v1946, %v2169
  %v2178 = vadd.f32 %v1947, %v2174
  %v2179 = vld [vmem:[%s7] sm:$0xf]
  %vm2180 = vcmask 31744
  %v2182 = vsel %vm2180, %v2177, 0
  %v2185 = vsel %vm2180, %v2178, 0
  %vm2187 = vcmask 1043456
  %v2189 = vsel %vm2187, %v2179, 0
  %2191 = vmatprep.subr.mxu0 0.0
  %2192 = vmatpush1.msra.mxu0 %v2189
  %2193 = vmatprep.subr.mxu0 0.0
  %2194 = vmatpush1.msra.mxu0 0.0
  %2195 = vmatprep.subr.mxu0 0.0
  %2196 = vmatpush1.msra.mxu0 0.0
  %2197 = vmatprep.subr.mxu0 0.0
  %2198 = vmatpush1.msra.mxu0 0.0
  %2199 = vmatprep.subr.mxu0 0.0
  %2200 = vmatpush1.msra.mxu0 0.0
  %2201 = vmatprep.subr.mxu0 0.0
  %2202 = vmatpush1.msra.mxu0 0.0
  %2203 = vmatprep.subr.mxu0 0.0
  %2204 = vmatpush1.msra.mxu0 0.0
  %2205 = vmatprep.subr.mxu0 0.0
  %2206 = vmatpush1.msra.mxu0 0.0
  %2207 = vmatprep.subr.mxu0 0.0
  %2208 = vmatpush1.msra.mxu0 0.0
  %2209 = vmatprep.subr.mxu0 0.0
  %2210 = vmatpush1.msra.mxu0 0.0
  %2211 = vmatprep.subr.mxu0 0.0
  %2212 = vmatpush1.msra.mxu0 0.0
  %2213 = vmatprep.subr.mxu0 0.0
  %2214 = vmatpush1.msra.mxu0 0.0
  %2215 = vmatprep.subr.mxu0 0.0
  %2216 = vmatpush1.msra.mxu0 0.0
  %2217 = vmatprep.subr.mxu0 0.0
  %2218 = vmatpush1.msra.mxu0 0.0
  %2219 = vmatprep.subr.mxu0 0.0
  %2220 = vmatpush1.msra.mxu0 0.0
  %2221 = vmatprep.subr.mxu0 0.0
  %2222 = vmatpush1.msra.mxu0 0.0
  %2223 = vmatprep.subr.mxu0 0.0
  %2224 = vmatpush1.msra.mxu0 0.0
  %2225 = vmatprep.subr.mxu0 0.0
  %2226 = vmatpush1.msra.mxu0 0.0
  %2227 = vmatprep.subr.mxu0 0.0
  %2228 = vmatpush1.msra.mxu0 0.0
  %2229 = vmatprep.subr.mxu0 0.0
  %2230 = vmatpush1.msra.mxu0 0.0
  %2231 = vmatprep.subr.mxu0 0.0
  %2232 = vmatpush1.msra.mxu0 0.0
  %2233 = vmatprep.subr.mxu0 0.0
  %2234 = vmatpush1.msra.mxu0 0.0
  %2235 = vmatprep.subr.mxu0 0.0
  %2236 = vmatpush1.msra.mxu0 0.0
  %2237 = vmatprep.subr.mxu0 0.0
  %2238 = vmatpush1.msra.mxu0 0.0
  %2239 = vmatprep.subr.mxu0 0.0
  %2240 = vmatpush1.msra.mxu0 0.0
  %2241 = vmatprep.subr.mxu0 0.0
  %2242 = vmatpush1.msra.mxu0 0.0
  %2243 = vmatprep.subr.mxu0 0.0
  %2244 = vmatpush1.msra.mxu0 0.0
  %2245 = vmatprep.subr.mxu0 0.0
  %2246 = vmatpush1.msra.mxu0 0.0
  %2247 = vmatprep.subr.mxu0 0.0
  %2248 = vmatpush1.msra.mxu0 0.0
  %2249 = vmatprep.subr.mxu0 0.0
  %2250 = vmatpush1.msra.mxu0 0.0
  %2251 = vmatprep.subr.mxu0 0.0
  %2252 = vmatpush1.msra.mxu0 0.0
  %2253 = vmatprep.subr.mxu0 0.0
  %2254 = vmatpush1.msra.mxu0 0.0
  %2255 = vmatprep.mubr.f32.mxu0 0.0
  %2256 = vmatmul.mubr.f32.gmra.mrb[0].mxu0 %v2182
  %v2257 = vpop.f32.mrb[0].mxu0
  %v2258 = vadd.f32 0.0, %v2257
  %v2259 = vpop.f32.mrb[0].mxu0
  %2260 = vmatprep.mubr.f32.mxu0 0.0
  %2261 = vmatmul.mubr.f32.gmra.mrb[0].mxu0 %v2185
  %v2262 = vpop.f32.mrb[0].mxu0
  %v2263 = vadd.f32 0.0, %v2262
  %v2264 = vpop.f32.mrb[0].mxu0
  %2265 = vdwg.mxu0
  %v2266 = vld [vmem:[%s8] sm:$0x1]
  %v2268 = vsel %vm2180, %v2266, 0
  %2270 = vmatprep.subr.mxu0 0.0
  %2271 = vmatpush1.xpose.msra.mxu0 %v2182
  %2272 = vmatprep.subr.mxu0 0.0
  %2273 = vmatpush1.xpose.msra.mxu0 %v2185
  %2274 = vmatprep.subr.mxu0 0.0
  %2275 = vmatpush1.xpose.msra.mxu0 0.0
  %2276 = vmatprep.subr.mxu0 0.0
  %2277 = vmatpush1.xpose.msra.mxu0 0.0
  %2278 = vmatprep.subr.mxu0 0.0
  %2279 = vmatpush1.xpose.msra.mxu0 0.0
  %2280 = vmatprep.subr.mxu0 0.0
  %2281 = vmatpush1.xpose.msra.mxu0 0.0
  %2282 = vmatprep.subr.mxu0 0.0
  %2283 = vmatpush1.xpose.msra.mxu0 0.0
  %2284 = vmatprep.subr.mxu0 0.0
  %2285 = vmatpush1.xpose.msra.mxu0 0.0
  %2286 = vmatprep.subr.mxu0 0.0
  %2287 = vmatpush1.xpose.msra.mxu0 0.0
  %2288 = vmatprep.subr.mxu0 0.0
  %2289 = vmatpush1.xpose.msra.mxu0 0.0
  %2290 = vmatprep.subr.mxu0 0.0
  %2291 = vmatpush1.xpose.msra.mxu0 0.0
  %2292 = vmatprep.subr.mxu0 0.0
  %2293 = vmatpush1.xpose.msra.mxu0 0.0
  %2294 = vmatprep.subr.mxu0 0.0
  %2295 = vmatpush1.xpose.msra.mxu0 0.0
  %2296 = vmatprep.subr.mxu0 0.0
  %2297 = vmatpush1.xpose.msra.mxu0 0.0
  %2298 = vmatprep.subr.mxu0 0.0
  %2299 = vmatpush1.xpose.msra.mxu0 0.0
  %2300 = vmatprep.subr.mxu0 0.0
  %2301 = vmatpush1.xpose.msra.mxu0 0.0
  %2302 = vmatprep.subr.mxu0 0.0
  %2303 = vmatpush1.xpose.msra.mxu0 0.0
  %2304 = vmatprep.subr.mxu0 0.0
  %2305 = vmatpush1.xpose.msra.mxu0 0.0
  %2306 = vmatprep.subr.mxu0 0.0
  %2307 = vmatpush1.xpose.msra.mxu0 0.0
  %2308 = vmatprep.subr.mxu0 0.0
  %2309 = vmatpush1.xpose.msra.mxu0 0.0
  %2310 = vmatprep.subr.mxu0 0.0
  %2311 = vmatpush1.xpose.msra.mxu0 0.0
  %2312 = vmatprep.subr.mxu0 0.0
  %2313 = vmatpush1.xpose.msra.mxu0 0.0
  %2314 = vmatprep.subr.mxu0 0.0
  %2315 = vmatpush1.xpose.msra.mxu0 0.0
  %2316 = vmatprep.subr.mxu0 0.0
  %2317 = vmatpush1.xpose.msra.mxu0 0.0
  %2318 = vmatprep.subr.mxu0 0.0
  %2319 = vmatpush1.xpose.msra.mxu0 0.0
  %2320 = vmatprep.subr.mxu0 0.0
  %2321 = vmatpush1.xpose.msra.mxu0 0.0
  %2322 = vmatprep.subr.mxu0 0.0
  %2323 = vmatpush1.xpose.msra.mxu0 0.0
  %2324 = vmatprep.subr.mxu0 0.0
  %2325 = vmatpush1.xpose.msra.mxu0 0.0
  %2326 = vmatprep.subr.mxu0 0.0
  %2327 = vmatpush1.xpose.msra.mxu0 0.0
  %2328 = vmatprep.subr.mxu0 0.0
  %2329 = vmatpush1.xpose.msra.mxu0 0.0
  %2330 = vmatprep.subr.mxu0 0.0
  %2331 = vmatpush1.xpose.msra.mxu0 0.0
  %2332 = vmatprep.subr.mxu0 0.0
  %2333 = vmatpush1.xpose.msra.mxu0 0.0
  %2334 = vmatprep.mubr.f32.mxu0 0.0
  %2335 = vmatmul.mubr.f32.gmra.mrb[0].mxu0 %v2268
  %v2336 = vpop.f32.mrb[0].mxu0
  %v2337 = vadd.f32 0.0, %v2336
  %v2338 = vpop.f32.mrb[0].mxu0
  %2339 = vdwg.mxu0
  %2341 = vset.pattern.permute.xlu0 0
  %2342 = vperm.xlu0 %2341, %v2258
  %v2343 = vpop.permute.xlu0 %2342
  %2346 = vset.pattern.permute.xlu0 0
  %2347 = vperm.xlu0 %2346, %v2263
  %v2348 = vpop.permute.xlu0 %2347
  %v2350 = vlaneseq
  %v2351 = vshrl.u32 %v2350, 7
  %v2352 = vsub.s32 0, %v2351
  %v2353 = vrot.slane %v2337, %v2352
  %v2354 = vadd.f32 %v2343, %v2353
  %v2355 = vadd.f32 %v2348, %v2353
  %vm2356 = vcmp.gt.f32.partialorder %v2354, 0.0
  %vm2357 = vcmp.gt.f32.partialorder %v2355, 0.0
  %v2358 = vmul.f32 %v2354, 0.2
  %v2359 = vmul.f32 %v2355, 0.2
  %v2360 = vsel %vm2356, %v2354, %v2358
  %v2361 = vsel %vm2357, %v2355, %v2359
  %v2362 = vadd.f32 %v2360, %v37
  %v2363 = vadd.f32 %v2361, %v38
  %v2364 = vsel %vm50, %v2362, -inf
  %2365 = vmax.xlane.f32.xlu0 %v2364
  %v2366 = vpop.xlane.xlu0 %2365
  %v2367 = vsel %vm50, %v2363, -inf
  %2368 = vmax.xlane.f32.xlu0 %v2367
  %v2369 = vpop.xlane.xlu0 %2368
  %v2370 = vsub.f32 %v2362, %v2366
  %v2371 = vsub.f32 %v2363, %v2369
  %v2372 = vmul.f32 %v2370, 1.442695
  %v2373 = vpow.pop %v2372
  %v2374 = vmul.f32 %v2371, 1.442695
  %v2375 = vpow.pop %v2374
  %v2376 = vsel %vm50, %v2373, 0.0
  %2377 = vadd.xlane.f32.xlu0 %v2376
  %v2378 = vpop.xlane.xlu0 %2377
  %v2379 = vsel %vm50, %v2375, 0.0
  %2380 = vadd.xlane.f32.xlu0 %v2379
  %v2381 = vpop.xlane.xlu0 %2380
  %v2383 = vsel %vm50, %v2373, 0
  %v2386 = vsel %vm50, %v2375, 0
  %2388 = vmatprep.subr.mxu0 0.0
  %2389 = vmatpush1.msra.mxu0 %v2177
  %2390 = vmatprep.subr.mxu0 0.0
  %2391 = vmatpush1.msra.mxu0 %v2178
  %2392 = vmatprep.subr.mxu0 0.0
  %2393 = vmatpush1.msra.mxu0 0.0
  %2394 = vmatprep.subr.mxu0 0.0
  %2395 = vmatpush1.msra.mxu0 0.0
  %2396 = vmatprep.subr.mxu0 0.0
  %2397 = vmatpush1.msra.mxu0 0.0
  %2398 = vmatprep.subr.mxu0 0.0
  %2399 = vmatpush1.msra.mxu0 0.0
  %2400 = vmatprep.subr.mxu0 0.0
  %2401 = vmatpush1.msra.mxu0 0.0
  %2402 = vmatprep.subr.mxu0 0.0
  %2403 = vmatpush1.msra.mxu0 0.0
  %2404 = vmatprep.subr.mxu0 0.0
  %2405 = vmatpush1.msra.mxu0 0.0
  %2406 = vmatprep.subr.mxu0 0.0
  %2407 = vmatpush1.msra.mxu0 0.0
  %2408 = vmatprep.subr.mxu0 0.0
  %2409 = vmatpush1.msra.mxu0 0.0
  %2410 = vmatprep.subr.mxu0 0.0
  %2411 = vmatpush1.msra.mxu0 0.0
  %2412 = vmatprep.subr.mxu0 0.0
  %2413 = vmatpush1.msra.mxu0 0.0
  %2414 = vmatprep.subr.mxu0 0.0
  %2415 = vmatpush1.msra.mxu0 0.0
  %2416 = vmatprep.subr.mxu0 0.0
  %2417 = vmatpush1.msra.mxu0 0.0
  %2418 = vmatprep.subr.mxu0 0.0
  %2419 = vmatpush1.msra.mxu0 0.0
  %2420 = vmatprep.subr.mxu0 0.0
  %2421 = vmatpush1.msra.mxu0 0.0
  %2422 = vmatprep.subr.mxu0 0.0
  %2423 = vmatpush1.msra.mxu0 0.0
  %2424 = vmatprep.subr.mxu0 0.0
  %2425 = vmatpush1.msra.mxu0 0.0
  %2426 = vmatprep.subr.mxu0 0.0
  %2427 = vmatpush1.msra.mxu0 0.0
  %2428 = vmatprep.subr.mxu0 0.0
  %2429 = vmatpush1.msra.mxu0 0.0
  %2430 = vmatprep.subr.mxu0 0.0
  %2431 = vmatpush1.msra.mxu0 0.0
  %2432 = vmatprep.subr.mxu0 0.0
  %2433 = vmatpush1.msra.mxu0 0.0
  %2434 = vmatprep.subr.mxu0 0.0
  %2435 = vmatpush1.msra.mxu0 0.0
  %2436 = vmatprep.subr.mxu0 0.0
  %2437 = vmatpush1.msra.mxu0 0.0
  %2438 = vmatprep.subr.mxu0 0.0
  %2439 = vmatpush1.msra.mxu0 0.0
  %2440 = vmatprep.subr.mxu0 0.0
  %2441 = vmatpush1.msra.mxu0 0.0
  %2442 = vmatprep.subr.mxu0 0.0
  %2443 = vmatpush1.msra.mxu0 0.0
  %2444 = vmatprep.subr.mxu0 0.0
  %2445 = vmatpush1.msra.mxu0 0.0
  %2446 = vmatprep.subr.mxu0 0.0
  %2447 = vmatpush1.msra.mxu0 0.0
  %2448 = vmatprep.subr.mxu0 0.0
  %2449 = vmatpush1.msra.mxu0 0.0
  %2450 = vmatprep.subr.mxu0 0.0
  %2451 = vmatpush1.msra.mxu0 0.0
  %2452 = vmatprep.mubr.f32.mxu0 0.0
  %2453 = vmatmul.mubr.f32.gmra.mrb[0].mxu0 %v2383
  %v2454 = vpop.f32.mrb[0].mxu0
  %v2455 = vadd.f32 0.0, %v2454
  %v2456 = vpop.f32.mrb[0].mxu0
  %2457 = vmatprep.mubr.f32.mxu0 0.0
  %2458 = vmatmul.mubr.f32.gmra.mrb[0].mxu0 %v2386
  %v2459 = vpop.f32.mrb[0].mxu0
  %v2460 = vadd.f32 0.0, %v2459
  %v2461 = vpop.f32.mrb[0].mxu0
  %2462 = vdwg.mxu0
  %v2463 = vrcp.pop %v2378
  %v2464 = vrcp.pop %v2381
  %v2465 = vmul.f32 %v2455, %v2463
  %v2466 = vmul.f32 %v2460, %v2464
  %v2467 = vld [vmem:[%s9] sm:$0x1]
  %v2469 = vlaneseq
  %v2470 = vshrl.u32 %v2469, 7
  %v2471 = vsub.s32 0, %v2470
  %v2472 = vrot.slane %v2467, %v2471
  %v2474 = vadd.f32 %v2465, %v2472
  %v2475 = vadd.f32 %v2466, %v2472
  %v2476 = vsel %vm2180, %v2474, -inf
  %2477 = vmax.xlane.f32.xlu0 %v2476
  %v2478 = vpop.xlane.xlu0 %2477
  %v2479 = vsel %vm2180, %v2475, -inf
  %2480 = vmax.xlane.f32.xlu0 %v2479
  %v2481 = vpop.xlane.xlu0 %2480
  %v2482 = vsub.f32 %v2474, %v2478
  %v2483 = vsub.f32 %v2475, %v2481
  %v2484 = vmul.f32 %v2482, 1.442695
  %v2485 = vpow.pop %v2484
  %v2486 = vmul.f32 %v2483, 1.442695
  %v2487 = vpow.pop %v2486
  %v2488 = vsel %vm2180, %v2485, 0.0
  %2489 = vadd.xlane.f32.xlu0 %v2488
  %v2490 = vpop.xlane.xlu0 %2489
  %v2491 = vsel %vm2180, %v2487, 0.0
  %2492 = vadd.xlane.f32.xlu0 %v2491
  %v2493 = vpop.xlane.xlu0 %2492
  %v2494 = vlog2.pop %v2490
  %v2495 = vmul.f32 %v2494, 0.6931472
  %v2496 = vlog2.pop %v2493
  %v2497 = vmul.f32 %v2496, 0.6931472
  %v2498 = vsub.f32 %v2482, %v2495
  %v2499 = vsub.f32 %v2483, %v2497
  %2500 = vst.msk [vmem:[%s10] sm:$0xff] %vm2180, %v2498
  %2501 = vst.msk [vmem:[%s10 + $0x8] sm:$0xff] %vm2180, %v2499
  // Predicated region
  $region42: #{tpu_custom_call.1} parent=0 // pred_check
    _
  $region43: #{tpu_custom_call.1} parent=0 // pred_check_branch
    %2503 = sbr.rel (0) target = $region45
  $region44: #{tpu_custom_call.1} parent=0 // pred_region
    _
  $region45: #{tpu_custom_call.1} parent=0 // pred_fallthru
    _
  // Predicated region
  $region46: #{tpu_custom_call.1} parent=0 // pred_check
    _
  $region47: #{tpu_custom_call.1} parent=0 // pred_check_branch
    %2505 = sbr.rel (0) target = $region49
  $region48: #{tpu_custom_call.1} parent=0 // pred_region
    _
  $region49: #{tpu_custom_call.1} parent=0 // pred_fallthru
    _

</llo_original>
